<compile_context>
chip_gen: v7x
topology: tpu7x:2x2x1
jax: 0.10.0
libtpu: 0.0.40
codegen_flags: <defaults>
</compile_context>

<pallas_src>
import functools
import math

import jax
import jax.numpy as jnp
from jax.experimental import pallas as pl
from jax.experimental.pallas import tpu as pltpu


def _round_up(x: int, m: int) -> int:
    return ((x + m - 1) // m) * m


# ----------------------------- Pallas kernel ------------------------------ #

def _encoder_kernel(x_ref, bias_ref,                       # (1,Lp,E) f32, (C,1,TK) f32
                    wq_ref, bq_ref,                        # (E,E) bf16, (1,E) f32
                    wk_ref, bk_ref,                        # (E,E) bf16, (1,E) f32
                    wv_ref, bv_ref,                        # (E,E) bf16, (1,E) f32
                    wo_ref, bo_ref,                        # (E,E) bf16, (1,E) f32
                    w1_ref, b1_ref,                        # (E,F) bf16, (1,F) f32
                    w2_ref, b2_ref,                        # (F,E) bf16, (1,E) f32
                    g1_ref, be1_ref,                       # (1,E), (1,E) f32
                    g2_ref, be2_ref,                       # (1,E), (1,E) f32
                    xout_ref,                              # (1,TL,E)
                    hid_ref,                               # (1,TL,F)
                    k_scr, v_scr,                          # (C,H,TK,Dh) bf16 scratch
                    q_scr,                                 # (H,TL,Dh)   bf16 scratch
                    o_scr,                                 # (TL,E)      f32  scratch
                    *, masked: bool):
    f32, bf16 = jnp.float32, jnp.bfloat16
    r = pl.program_id(1)

    Lp, E = x_ref.shape[1], x_ref.shape[2]
    C, H, TK, Dh = k_scr.shape
    TL = xout_ref.shape[1]

    # ---- K/V projections: once per batch (row-tile 0), full-E-wide matmuls ----
    @pl.when(r == 0)
    def _():
        xkv = x_ref[0].astype(bf16)                                       # (Lp, E)
        k = jnp.dot(xkv, wk_ref[...], preferred_element_type=f32) + bk_ref[...]
        v = jnp.dot(xkv, wv_ref[...], preferred_element_type=f32) + bv_ref[...]
        kb = k.astype(bf16)
        vb = v.astype(bf16)
        # chunk-major, head-major resident layout (static slices / stores only)
        for c in range(C):
            for h in range(H):
                k_scr[c, h] = kb[c * TK:(c + 1) * TK, h * Dh:(h + 1) * Dh]
                v_scr[c, h] = vb[c * TK:(c + 1) * TK, h * Dh:(h + 1) * Dh]

    # ---- Q projection for this row tile (1/sqrt(Dh) folded into wq / bq) ----
    row0 = pl.multiple_of(r * TL, TL)
    xq = x_ref[0, pl.ds(row0, TL), :]                                      # (TL, E) f32
    q = jnp.dot(xq.astype(bf16), wq_ref[...],
                preferred_element_type=f32) + bq_ref[...]                  # (TL, E) f32
    qb = q.astype(bf16)
    for h in range(H):
        q_scr[h] = qb[:, h * Dh:(h + 1) * Dh]
    qh = q_scr[...]                                                        # (H,TL,Dh) bf16

    # ---- flash-style attention over key chunks (online softmax, f32) ----
    def chunk_body(c, carry):
        m_prev, l_prev, acc_prev = carry
        kc = k_scr[c]                                                      # (H,TK,Dh) bf16
        vc = v_scr[c]
        s = jnp.einsum('htd,hsd->hts', qh, kc,
                       preferred_element_type=f32)                         # (H,TL,TK) f32
        if masked:                         # additive key-padding bias row (static branch)
            s = s + bias_ref[c]                                            # (1,TK) -> bcast
        m_new = jnp.maximum(m_prev, jnp.max(s, axis=-1, keepdims=True))
        alpha = jnp.exp(m_prev - m_new)
        p = jnp.exp(s - m_new)
        l_new = alpha * l_prev + jnp.sum(p, axis=-1, keepdims=True)
        acc_new = alpha * acc_prev + jnp.einsum('hts,hsd->htd', p.astype(bf16), vc,
                                                preferred_element_type=f32)
        return m_new, l_new, acc_new

    carry0 = (jnp.full((H, TL, 1), -jnp.inf, f32),
              jnp.zeros((H, TL, 1), f32),
              jnp.zeros((H, TL, Dh), f32))
    _, l_fin, acc = jax.lax.fori_loop(0, C, chunk_body, carry0, unroll=C <= 4)

    # normalize AFTER the PV matmul: H*TL*Dh multiplies instead of H*TL*Lp
    o = acc * pl.reciprocal(l_fin, approx=True)                            # (H,TL,Dh) f32

    # ---- recombine heads, single full-width output projection ----
    for h in range(H):
        o_scr[:, h * Dh:(h + 1) * Dh] = o[h]
    attn_out = jnp.dot(o_scr[...].astype(bf16), wo_ref[...],
                       preferred_element_type=f32) + bo_ref[...]           # (TL, E)

    # ---- residual + LayerNorm 1 (f32 VPU) ----
    y = xq + attn_out
    mu = jnp.mean(y, axis=-1, keepdims=True)
    var = jnp.mean((y - mu) ** 2, axis=-1, keepdims=True)
    x1 = (y - mu) * jax.lax.rsqrt(var + 1e-5) * g1_ref[...] + be1_ref[...]

    # ---- feed-forward (bf16 MXU, f32 accumulate) ----
    hidden = jnp.dot(x1.astype(bf16), w1_ref[...],
                     preferred_element_type=f32) + b1_ref[...]             # (TL, F)
    hid_ref[0] = hidden.astype(hid_ref.dtype)
    ff = jnp.dot(jnp.maximum(hidden, 0.0).astype(bf16), w2_ref[...],
                 preferred_element_type=f32) + b2_ref[...]                 # (TL, E)

    # ---- residual + LayerNorm 2 (f32 VPU) ----
    y2 = x1 + ff
    mu2 = jnp.mean(y2, axis=-1, keepdims=True)
    var2 = jnp.mean((y2 - mu2) ** 2, axis=-1, keepdims=True)
    xout_ref[0] = ((y2 - mu2) * jax.lax.rsqrt(var2 + 1e-5) * g2_ref[...]
                   + be2_ref[...]).astype(xout_ref.dtype)


# ------------------------------ Wrapper ----------------------------------- #

def transformer_encoder(x_in, prep, *, num_heads: int, block_rows: int = 256,
                        hidden_dtype=jnp.float32):
    """x_in: (L, N, E) float32 (nn.MultiheadAttention batch_first=False layout).

    Returns (x, hidden) with shapes (L, N, E) and (L, N, F).
    `hidden_dtype` may be set to bfloat16 to halve the dominant HBM writeback
    stream if downstream tolerates it (default keeps f32 PyTorch parity)."""
    L, N, E = x_in.shape
    F = prep['w1'].shape[1]
    H = num_heads
    assert E % H == 0, "embed_dim must be divisible by num_heads"
    Dh = E // H

    # Row tiling: minimize padding, TL multiple of 8 sublanes, target <= block_rows
    # (256 feeds the 256-wide MXU on v6e/v7x; also fine on v5e).
    R = pl.cdiv(L, block_rows)
    TL = _round_up(pl.cdiv(L, R), 8)
    Lp = R * TL
    # Key chunking for the online-softmax loop reuses the row tile size.
    TK, C = TL, R

    x_bse = jnp.transpose(x_in, (1, 0, 2))                 # (N, L, E)
    if Lp != L:
        x_bse = jnp.pad(x_bse, ((0, 0), (0, Lp - L), (0, 0)))

    masked = Lp > L
    # additive key-padding bias, pre-chunked so the kernel indexes chunk c directly
    bias = jnp.where(jnp.arange(Lp) < L, 0.0, -1e30).astype(jnp.float32)
    bias = bias.reshape(C, 1, TK)

    def resident(a):
        # constant index map + single buffer: fetched from HBM exactly once
        return pl.BlockSpec(a.shape, lambda b, r: (0,) * a.ndim,
                            pipeline_mode=pl.Buffered(1))

    grid_spec = pltpu.PrefetchScalarGridSpec(
        num_scalar_prefetch=0,
        grid=(N, R),
        in_specs=[
            # single activation stream: per-batch resident block; query rows are
            # sliced from it in-kernel, K/V computed from it once per batch.
            pl.BlockSpec((1, Lp, E), lambda b, r: (b, 0, 0)),
            resident(bias),
            resident(prep['wq']), resident(prep['bq']),
            resident(prep['wk']), resident(prep['bk']),
            resident(prep['wv']), resident(prep['bv']),
            resident(prep['wo']), resident(prep['bo']),
            resident(prep['w1']), resident(prep['b1']),
            resident(prep['w2']), resident(prep['b2']),
            resident(prep['g1']), resident(prep['be1']),
            resident(prep['g2']), resident(prep['be2']),
        ],
        out_specs=[
            pl.BlockSpec((1, TL, E), lambda b, r: (b, r, 0)),
            pl.BlockSpec((1, TL, F), lambda b, r: (b, r, 0)),
        ],
        scratch_shapes=[
            pltpu.VMEM((C, H, TK, Dh), jnp.bfloat16),      # K (per-batch resident)
            pltpu.VMEM((C, H, TK, Dh), jnp.bfloat16),      # V (per-batch resident)
            pltpu.VMEM((H, TL, Dh), jnp.bfloat16),         # per-tile Q head split
            pltpu.VMEM((TL, E), jnp.float32),              # head recombination
        ],
    )

    # --- scoped VMEM budget sized from actual tiles, clamped to physical VMEM ---
    hid_isz = jnp.dtype(hidden_dtype).itemsize
    lane = lambda n: _round_up(max(int(n), 1), 128)
    weight_bytes = (4 * E * lane(E) + E * lane(F) + F * lane(E)) * 2 \
        + (8 * lane(E) + lane(F)) * 4
    io_bytes = (2 * Lp * lane(E) * 4                       # x block (double-buffered)
                + C * lane(TK) * 4                         # bias
                + 2 * (TL * lane(E) * 4 + TL * lane(F) * hid_isz))
    scratch_bytes = (2 * C * H * _round_up(TK, 16) * lane(Dh) * 2
                     + H * _round_up(TL, 16) * lane(Dh) * 2
                     + TL * lane(E) * 4)
    interm_bytes = (2 * Lp * lane(E) * 4                   # K/V f32 temporaries (r == 0)
                    + 3 * H * TL * lane(TK) * 4            # per-chunk scores / probs
                    + 4 * H * TL * lane(Dh) * 4            # m / l / acc / o
                    + 2 * TL * lane(F) * 4)                # hidden / relu
    vmem_limit = weight_bytes + io_bytes + scratch_bytes + interm_bytes + (4 << 20)
    try:
        cap = int(getattr(pltpu.get_tpu_info(), "vmem_capacity_bytes", 64 << 20))
    except Exception:
        cap = 64 << 20                                     # conservative (v7x-sized)
    vmem_limit = int(min(max(vmem_limit, 16 << 20), cap - (8 << 20)))

    kernel = functools.partial(_encoder_kernel, masked=masked)

    x_out, hidden = pl.pallas_call(
        kernel,
        out_shape=(jax.ShapeDtypeStruct((N, Lp, E), jnp.float32),
                   jax.ShapeDtypeStruct((N, Lp, F), hidden_dtype)),
        grid_spec=grid_spec,
        compiler_params=pltpu.CompilerParams(
            dimension_semantics=("parallel", "arbitrary"),
            vmem_limit_bytes=vmem_limit),
    )(x_bse, bias,
      prep['wq'], prep['bq'], prep['wk'], prep['bk'], prep['wv'], prep['bv'],
      prep['wo'], prep['bo'], prep['w1'], prep['b1'], prep['w2'], prep['b2'],
      prep['g1'], prep['be1'], prep['g2'], prep['be2'])

    # drop row padding, back to PyTorch (L, N, *) layout
    x_out = jnp.transpose(x_out[:, :L], (1, 0, 2))
    hidden = jnp.transpose(hidden[:, :L], (1, 0, 2))
    return x_out, hidden


# ----------------------- Parameter init / preparation ---------------------- #

def init_params(key, embed_dim, feedforward_dim):
    """Raw f32 parameters in PyTorch-equivalent (pre-transposed, in x out) layout."""
    E, F = embed_dim, feedforward_dim
    ks = jax.random.split(key, 12)
    s = 0.05
    return dict(
        wq_t=s * jax.random.normal(ks[0], (E, E), jnp.float32),
        bq=s * jax.random.normal(ks[1], (E,), jnp.float32),
        wk_t=s * jax.random.normal(ks[2], (E, E), jnp.float32),
        bk=s * jax.random.normal(ks[3], (E,), jnp.float32),
        wv_t=s * jax.random.normal(ks[4], (E, E), jnp.float32),
        bv=s * jax.random.normal(ks[5], (E,), jnp.float32),
        wo_t=s * jax.random.normal(ks[6], (E, E), jnp.float32),
        bo=s * jax.random.normal(ks[7], (E,), jnp.float32),
        w1_t=s * jax.random.normal(ks[8], (E, F), jnp.float32),
        b1=s * jax.random.normal(ks[9], (F,), jnp.float32),
        w2_t=s * jax.random.normal(ks[10], (F, E), jnp.float32),
        b2=s * jax.random.normal(ks[11], (E,), jnp.float32),
        g1=jnp.ones((E,), jnp.float32), be1=jnp.zeros((E,), jnp.float32),
        g2=jnp.ones((E,), jnp.float32), be2=jnp.zeros((E,), jnp.float32),
    )


def prepare_params(params, *, num_heads: int):
    """One-time transform: bf16 matmul weights (packed, full-width) and the
    1/sqrt(Dh) softmax scale folded into the Q projection."""
    E = params['wq_t'].shape[0]
    Dh = E // num_heads
    scale = 1.0 / math.sqrt(Dh)
    row = lambda b: b.reshape(1, -1).astype(jnp.float32)
    return dict(
        wq=(params['wq_t'] * scale).astype(jnp.bfloat16), bq=row(params['bq'] * scale),
        wk=params['wk_t'].astype(jnp.bfloat16), bk=row(params['bk']),
        wv=params['wv_t'].astype(jnp.bfloat16), bv=row(params['bv']),
        wo=params['wo_t'].astype(jnp.bfloat16), bo=row(params['bo']),
        w1=params['w1_t'].astype(jnp.bfloat16), b1=row(params['b1']),
        w2=params['w2_t'].astype(jnp.bfloat16), b2=row(params['b2']),
        g1=row(params['g1']), be1=row(params['be1']),
        g2=row(params['g2']), be2=row(params['be2']),
    )


# --------------------------- Pure-JAX reference ---------------------------- #

def _reference(x_in, params, *, num_heads: int):
    """PyTorch semantics; mirrors the kernel's bf16-at-MXU numerics."""
    bf = lambda t: t.astype(jnp.bfloat16)
    L, N, E = x_in.shape
    H = num_heads
    Dh = E // H

    def mm(a, b):
        return jnp.einsum('...i,ij->...j', bf(a), bf(b),
                          preferred_element_type=jnp.float32)

    q = mm(x_in, params['wq_t']) + params['bq']
    k = mm(x_in, params['wk_t']) + params['bk']
    v = mm(x_in, params['wv_t']) + params['bv']

    def heads(t):          # (L, N, E) -> (N, H, L, Dh)
        return jnp.transpose(t.reshape(L, N, H, Dh), (1, 2, 0, 3))

    qh = heads(q) * (1.0 / math.sqrt(Dh))
    kh, vh = heads(k), heads(v)
    s = jnp.einsum('nhld,nhmd->nhlm', bf(qh), bf(kh),
                   preferred_element_type=jnp.float32)
    p = jax.nn.softmax(s, axis=-1)
    o = jnp.einsum('nhlm,nhmd->nhld', bf(p), bf(vh),
                   preferred_element_type=jnp.float32)
    o = jnp.transpose(o, (2, 0, 1, 3)).reshape(L, N, E)
    attn_out = mm(o, params['wo_t']) + params['bo']

    def ln(y, g, b):
        mu = jnp.mean(y, -1, keepdims=True)
        var = jnp.mean((y - mu) ** 2, -1, keepdims=True)
        return (y - mu) * jax.lax.rsqrt(var + 1e-5) * g + b

    x1 = ln(x_in + attn_out, params['g1'], params['be1'])
    hidden = mm(x1, params['w1_t']) + params['b1']
    ff = mm(jnp.maximum(hidden, 0.0), params['w2_t']) + params['b2']
    x2 = ln(x1 + ff, params['g2'], params['be2'])
    return x2, hidden


# ------------------------------- Main -------------------------------------- #

if __name__ == "__main__":
    SEQ, BATCH, EMBED, HEADS, FFN = 8, 2, 32, 4, 64

    key = jax.random.PRNGKey(0)
    k_x, k_p = jax.random.split(key)
    x_in = jax.random.normal(k_x, (SEQ, BATCH, EMBED), jnp.float32)
    params = init_params(k_p, EMBED, FFN)
    prep = prepare_params(params, num_heads=HEADS)

    x_out, hidden = transformer_encoder(x_in, prep, num_heads=HEADS)
    jax.block_until_ready((x_out, hidden))

    # sanity check against a pure-JAX reference (bf16-matmul numerics)
    x_ref, h_ref = _reference(x_in, params, num_heads=HEADS)
    assert x_out.shape == (SEQ, BATCH, EMBED) and hidden.shape == (SEQ, BATCH, FFN)
    assert jnp.allclose(x_out, x_ref, atol=2e-2, rtol=2e-2), \
        float(jnp.max(jnp.abs(x_out - x_ref)))
    assert jnp.allclose(hidden, h_ref, atol=2e-2, rtol=2e-2), \
        float(jnp.max(jnp.abs(hidden - h_ref)))

    print("KERNEL_OK")
</pallas_src>

<mosaic_0001>
module attributes {stable_mosaic.version = 11 : i64} {
  func.func @_encoder_kernel(%arg0: i32, %arg1: i32, %arg2: memref<1x8x32xf32, #tpu.memory_space<vmem>>, %arg3: memref<1x1x8xf32, #tpu.memory_space<vmem>>, %arg4: memref<32x32xbf16, #tpu.memory_space<vmem>>, %arg5: memref<1x32xf32, #tpu.memory_space<vmem>>, %arg6: memref<32x32xbf16, #tpu.memory_space<vmem>>, %arg7: memref<1x32xf32, #tpu.memory_space<vmem>>, %arg8: memref<32x32xbf16, #tpu.memory_space<vmem>>, %arg9: memref<1x32xf32, #tpu.memory_space<vmem>>, %arg10: memref<32x32xbf16, #tpu.memory_space<vmem>>, %arg11: memref<1x32xf32, #tpu.memory_space<vmem>>, %arg12: memref<32x64xbf16, #tpu.memory_space<vmem>>, %arg13: memref<1x64xf32, #tpu.memory_space<vmem>>, %arg14: memref<64x32xbf16, #tpu.memory_space<vmem>>, %arg15: memref<1x32xf32, #tpu.memory_space<vmem>>, %arg16: memref<1x32xf32, #tpu.memory_space<vmem>>, %arg17: memref<1x32xf32, #tpu.memory_space<vmem>>, %arg18: memref<1x32xf32, #tpu.memory_space<vmem>>, %arg19: memref<1x32xf32, #tpu.memory_space<vmem>>, %arg20: memref<1x8x32xf32, #tpu.memory_space<vmem>>, %arg21: memref<1x8x64xf32, #tpu.memory_space<vmem>>, %arg22: memref<1x4x8x8xbf16, #tpu.memory_space<vmem>>, %arg23: memref<1x4x8x8xbf16, #tpu.memory_space<vmem>>, %arg24: memref<4x8x8xbf16, #tpu.memory_space<vmem>>, %arg25: memref<8x32xf32, #tpu.memory_space<vmem>>) attributes {dimension_semantics = [#tpu.dimension_semantics<parallel>, #tpu.dimension_semantics<arbitrary>], iteration_bounds = array<i64: 2, 1>, scalar_prefetch = 0 : i64, scratch_operands = 4 : i64, tpu.core_type = #tpu.core_type<tc>, window_params = [{transform_indices = @transform_0, window_bounds = array<i64: 1, 8, 32>}, {pipeline_mode = #tpu.pipeline_mode<synchronous>, transform_indices = @transform_1, window_bounds = array<i64: 1, 1, 8>}, {pipeline_mode = #tpu.pipeline_mode<synchronous>, transform_indices = @transform_2, window_bounds = array<i64: 32, 32>}, {pipeline_mode = #tpu.pipeline_mode<synchronous>, transform_indices = @transform_3, window_bounds = array<i64: 1, 32>}, {pipeline_mode = #tpu.pipeline_mode<synchronous>, transform_indices = @transform_4, window_bounds = array<i64: 32, 32>}, {pipeline_mode = #tpu.pipeline_mode<synchronous>, transform_indices = @transform_5, window_bounds = array<i64: 1, 32>}, {pipeline_mode = #tpu.pipeline_mode<synchronous>, transform_indices = @transform_6, window_bounds = array<i64: 32, 32>}, {pipeline_mode = #tpu.pipeline_mode<synchronous>, transform_indices = @transform_7, window_bounds = array<i64: 1, 32>}, {pipeline_mode = #tpu.pipeline_mode<synchronous>, transform_indices = @transform_8, window_bounds = array<i64: 32, 32>}, {pipeline_mode = #tpu.pipeline_mode<synchronous>, transform_indices = @transform_9, window_bounds = array<i64: 1, 32>}, {pipeline_mode = #tpu.pipeline_mode<synchronous>, transform_indices = @transform_10, window_bounds = array<i64: 32, 64>}, {pipeline_mode = #tpu.pipeline_mode<synchronous>, transform_indices = @transform_11, window_bounds = array<i64: 1, 64>}, {pipeline_mode = #tpu.pipeline_mode<synchronous>, transform_indices = @transform_12, window_bounds = array<i64: 64, 32>}, {pipeline_mode = #tpu.pipeline_mode<synchronous>, transform_indices = @transform_13, window_bounds = array<i64: 1, 32>}, {pipeline_mode = #tpu.pipeline_mode<synchronous>, transform_indices = @transform_14, window_bounds = array<i64: 1, 32>}, {pipeline_mode = #tpu.pipeline_mode<synchronous>, transform_indices = @transform_15, window_bounds = array<i64: 1, 32>}, {pipeline_mode = #tpu.pipeline_mode<synchronous>, transform_indices = @transform_16, window_bounds = array<i64: 1, 32>}, {pipeline_mode = #tpu.pipeline_mode<synchronous>, transform_indices = @transform_17, window_bounds = array<i64: 1, 32>}, {transform_indices = @transform_18, window_bounds = array<i64: 1, 8, 32>}, {transform_indices = @transform_19, window_bounds = array<i64: 1, 8, 64>}]} {
    %c0_i32 = arith.constant 0 : i32
    %0 = arith.cmpi eq, %arg1, %c0_i32 : i32
    %1 = arith.extui %0 : i1 to i32
    %c0_i32_0 = arith.constant 0 : i32
    %2 = arith.cmpi ne, %1, %c0_i32_0 : i32
    scf.if %2 {
      %c0_79 = arith.constant 0 : index
      %c0_80 = arith.constant 0 : index
      %c0_81 = arith.constant 0 : index
      %151 = vector.load %arg2[%c0_79, %c0_80, %c0_81] : memref<1x8x32xf32, #tpu.memory_space<vmem>>, vector<1x8x32xf32>
      %152 = vector.shape_cast %151 : vector<1x8x32xf32> to vector<8x32xf32>
      %153 = arith.truncf %152 : vector<8x32xf32> to vector<8x32xbf16>
      %c0_82 = arith.constant 0 : index
      %c0_83 = arith.constant 0 : index
      %154 = vector.load %arg6[%c0_82, %c0_83] : memref<32x32xbf16, #tpu.memory_space<vmem>>, vector<32x32xbf16>
      %cst_84 = arith.constant dense<0.000000e+00> : vector<8x32xf32>
      %155 = tpu.matmul %153, %154, %cst_84 {dimension_numbers = #tpu.dot_dimension_numbers<[1], [0], [0], [1], [0, 0, 1, 1], [], []>} : vector<8x32xbf16>, vector<32x32xbf16>, vector<8x32xf32> -> vector<8x32xf32>
      %c0_85 = arith.constant 0 : index
      %c0_86 = arith.constant 0 : index
      %156 = vector.load %arg7[%c0_85, %c0_86] : memref<1x32xf32, #tpu.memory_space<vmem>>, vector<1x32xf32>
      %157 = vector.broadcast %156 : vector<1x32xf32> to vector<8x32xf32>
      %158 = arith.addf %155, %157 : vector<8x32xf32>
      %c0_87 = arith.constant 0 : index
      %c0_88 = arith.constant 0 : index
      %159 = vector.load %arg8[%c0_87, %c0_88] : memref<32x32xbf16, #tpu.memory_space<vmem>>, vector<32x32xbf16>
      %cst_89 = arith.constant dense<0.000000e+00> : vector<8x32xf32>
      %160 = tpu.matmul %153, %159, %cst_89 {dimension_numbers = #tpu.dot_dimension_numbers<[1], [0], [0], [1], [0, 0, 1, 1], [], []>} : vector<8x32xbf16>, vector<32x32xbf16>, vector<8x32xf32> -> vector<8x32xf32>
      %c0_90 = arith.constant 0 : index
      %c0_91 = arith.constant 0 : index
      %161 = vector.load %arg9[%c0_90, %c0_91] : memref<1x32xf32, #tpu.memory_space<vmem>>, vector<1x32xf32>
      %162 = vector.broadcast %161 : vector<1x32xf32> to vector<8x32xf32>
      %163 = arith.addf %160, %162 : vector<8x32xf32>
      %164 = arith.truncf %158 : vector<8x32xf32> to vector<8x32xbf16>
      %165 = arith.truncf %163 : vector<8x32xf32> to vector<8x32xbf16>
      %166 = vector.extract_strided_slice %164 {offsets = [0, 0], sizes = [8, 8], strides = [1, 1]} : vector<8x32xbf16> to vector<8x8xbf16>
      %c0_92 = arith.constant 0 : index
      %c0_93 = arith.constant 0 : index
      %c0_94 = arith.constant 0 : index
      %c0_95 = arith.constant 0 : index
      %167 = vector.load %arg22[%c0_92, %c0_93, %c0_94, %c0_95] : memref<1x4x8x8xbf16, #tpu.memory_space<vmem>>, vector<1x1x8x8xbf16>
      %168 = vector.shape_cast %167 : vector<1x1x8x8xbf16> to vector<8x8xbf16>
      %169 = vector.shape_cast %166 : vector<8x8xbf16> to vector<1x1x8x8xbf16>
      tpu.vector_store %arg22[%c0_92, %c0_93, %c0_94, %c0_95], %169 {strides = array<i32>} : memref<1x4x8x8xbf16, #tpu.memory_space<vmem>>, vector<1x1x8x8xbf16>,
      %170 = vector.extract_strided_slice %165 {offsets = [0, 0], sizes = [8, 8], strides = [1, 1]} : vector<8x32xbf16> to vector<8x8xbf16>
      %c0_96 = arith.constant 0 : index
      %c0_97 = arith.constant 0 : index
      %c0_98 = arith.constant 0 : index
      %c0_99 = arith.constant 0 : index
      %171 = vector.load %arg23[%c0_96, %c0_97, %c0_98, %c0_99] : memref<1x4x8x8xbf16, #tpu.memory_space<vmem>>, vector<1x1x8x8xbf16>
      %172 = vector.shape_cast %171 : vector<1x1x8x8xbf16> to vector<8x8xbf16>
      %173 = vector.shape_cast %170 : vector<8x8xbf16> to vector<1x1x8x8xbf16>
      tpu.vector_store %arg23[%c0_96, %c0_97, %c0_98, %c0_99], %173 {strides = array<i32>} : memref<1x4x8x8xbf16, #tpu.memory_space<vmem>>, vector<1x1x8x8xbf16>,
      %174 = vector.extract_strided_slice %164 {offsets = [0, 8], sizes = [8, 8], strides = [1, 1]} : vector<8x32xbf16> to vector<8x8xbf16>
      %c0_100 = arith.constant 0 : index
      %c1_101 = arith.constant 1 : index
      %c0_102 = arith.constant 0 : index
      %c0_103 = arith.constant 0 : index
      %175 = vector.load %arg22[%c0_100, %c1_101, %c0_102, %c0_103] : memref<1x4x8x8xbf16, #tpu.memory_space<vmem>>, vector<1x1x8x8xbf16>
      %176 = vector.shape_cast %175 : vector<1x1x8x8xbf16> to vector<8x8xbf16>
      %177 = vector.shape_cast %174 : vector<8x8xbf16> to vector<1x1x8x8xbf16>
      tpu.vector_store %arg22[%c0_100, %c1_101, %c0_102, %c0_103], %177 {strides = array<i32>} : memref<1x4x8x8xbf16, #tpu.memory_space<vmem>>, vector<1x1x8x8xbf16>,
      %178 = vector.extract_strided_slice %165 {offsets = [0, 8], sizes = [8, 8], strides = [1, 1]} : vector<8x32xbf16> to vector<8x8xbf16>
      %c0_104 = arith.constant 0 : index
      %c1_105 = arith.constant 1 : index
      %c0_106 = arith.constant 0 : index
      %c0_107 = arith.constant 0 : index
      %179 = vector.load %arg23[%c0_104, %c1_105, %c0_106, %c0_107] : memref<1x4x8x8xbf16, #tpu.memory_space<vmem>>, vector<1x1x8x8xbf16>
      %180 = vector.shape_cast %179 : vector<1x1x8x8xbf16> to vector<8x8xbf16>
      %181 = vector.shape_cast %178 : vector<8x8xbf16> to vector<1x1x8x8xbf16>
      tpu.vector_store %arg23[%c0_104, %c1_105, %c0_106, %c0_107], %181 {strides = array<i32>} : memref<1x4x8x8xbf16, #tpu.memory_space<vmem>>, vector<1x1x8x8xbf16>,
      %182 = vector.extract_strided_slice %164 {offsets = [0, 16], sizes = [8, 8], strides = [1, 1]} : vector<8x32xbf16> to vector<8x8xbf16>
      %c0_108 = arith.constant 0 : index
      %c2_109 = arith.constant 2 : index
      %c0_110 = arith.constant 0 : index
      %c0_111 = arith.constant 0 : index
      %183 = vector.load %arg22[%c0_108, %c2_109, %c0_110, %c0_111] : memref<1x4x8x8xbf16, #tpu.memory_space<vmem>>, vector<1x1x8x8xbf16>
      %184 = vector.shape_cast %183 : vector<1x1x8x8xbf16> to vector<8x8xbf16>
      %185 = vector.shape_cast %182 : vector<8x8xbf16> to vector<1x1x8x8xbf16>
      tpu.vector_store %arg22[%c0_108, %c2_109, %c0_110, %c0_111], %185 {strides = array<i32>} : memref<1x4x8x8xbf16, #tpu.memory_space<vmem>>, vector<1x1x8x8xbf16>,
      %186 = vector.extract_strided_slice %165 {offsets = [0, 16], sizes = [8, 8], strides = [1, 1]} : vector<8x32xbf16> to vector<8x8xbf16>
      %c0_112 = arith.constant 0 : index
      %c2_113 = arith.constant 2 : index
      %c0_114 = arith.constant 0 : index
      %c0_115 = arith.constant 0 : index
      %187 = vector.load %arg23[%c0_112, %c2_113, %c0_114, %c0_115] : memref<1x4x8x8xbf16, #tpu.memory_space<vmem>>, vector<1x1x8x8xbf16>
      %188 = vector.shape_cast %187 : vector<1x1x8x8xbf16> to vector<8x8xbf16>
      %189 = vector.shape_cast %186 : vector<8x8xbf16> to vector<1x1x8x8xbf16>
      tpu.vector_store %arg23[%c0_112, %c2_113, %c0_114, %c0_115], %189 {strides = array<i32>} : memref<1x4x8x8xbf16, #tpu.memory_space<vmem>>, vector<1x1x8x8xbf16>,
      %190 = vector.extract_strided_slice %164 {offsets = [0, 24], sizes = [8, 8], strides = [1, 1]} : vector<8x32xbf16> to vector<8x8xbf16>
      %c0_116 = arith.constant 0 : index
      %c3_117 = arith.constant 3 : index
      %c0_118 = arith.constant 0 : index
      %c0_119 = arith.constant 0 : index
      %191 = vector.load %arg22[%c0_116, %c3_117, %c0_118, %c0_119] : memref<1x4x8x8xbf16, #tpu.memory_space<vmem>>, vector<1x1x8x8xbf16>
      %192 = vector.shape_cast %191 : vector<1x1x8x8xbf16> to vector<8x8xbf16>
      %193 = vector.shape_cast %190 : vector<8x8xbf16> to vector<1x1x8x8xbf16>
      tpu.vector_store %arg22[%c0_116, %c3_117, %c0_118, %c0_119], %193 {strides = array<i32>} : memref<1x4x8x8xbf16, #tpu.memory_space<vmem>>, vector<1x1x8x8xbf16>,
      %194 = vector.extract_strided_slice %165 {offsets = [0, 24], sizes = [8, 8], strides = [1, 1]} : vector<8x32xbf16> to vector<8x8xbf16>
      %c0_120 = arith.constant 0 : index
      %c3_121 = arith.constant 3 : index
      %c0_122 = arith.constant 0 : index
      %c0_123 = arith.constant 0 : index
      %195 = vector.load %arg23[%c0_120, %c3_121, %c0_122, %c0_123] : memref<1x4x8x8xbf16, #tpu.memory_space<vmem>>, vector<1x1x8x8xbf16>
      %196 = vector.shape_cast %195 : vector<1x1x8x8xbf16> to vector<8x8xbf16>
      %197 = vector.shape_cast %194 : vector<8x8xbf16> to vector<1x1x8x8xbf16>
      tpu.vector_store %arg23[%c0_120, %c3_121, %c0_122, %c0_123], %197 {strides = array<i32>} : memref<1x4x8x8xbf16, #tpu.memory_space<vmem>>, vector<1x1x8x8xbf16>,
    } else {
    }
    %c8_i32 = arith.constant 8 : i32
    %3 = arith.muli %arg1, %c8_i32 : i32
    %4 = tpu.assume_multiple %3, 8 : i32
    %c0 = arith.constant 0 : index
    %5 = arith.index_cast %4 : i32 to index
    %c0_1 = arith.constant 0 : index
    %6 = vector.load %arg2[%c0, %5, %c0_1] : memref<1x8x32xf32, #tpu.memory_space<vmem>>, vector<1x8x32xf32>
    %7 = vector.shape_cast %6 : vector<1x8x32xf32> to vector<8x32xf32>
    %8 = arith.truncf %7 : vector<8x32xf32> to vector<8x32xbf16>
    %c0_2 = arith.constant 0 : index
    %c0_3 = arith.constant 0 : index
    %9 = vector.load %arg4[%c0_2, %c0_3] : memref<32x32xbf16, #tpu.memory_space<vmem>>, vector<32x32xbf16>
    %cst = arith.constant dense<0.000000e+00> : vector<8x32xf32>
    %10 = tpu.matmul %8, %9, %cst {dimension_numbers = #tpu.dot_dimension_numbers<[1], [0], [0], [1], [0, 0, 1, 1], [], []>} : vector<8x32xbf16>, vector<32x32xbf16>, vector<8x32xf32> -> vector<8x32xf32>
    %c0_4 = arith.constant 0 : index
    %c0_5 = arith.constant 0 : index
    %11 = vector.load %arg5[%c0_4, %c0_5] : memref<1x32xf32, #tpu.memory_space<vmem>>, vector<1x32xf32>
    %12 = vector.broadcast %11 : vector<1x32xf32> to vector<8x32xf32>
    %13 = arith.addf %10, %12 : vector<8x32xf32>
    %14 = arith.truncf %13 : vector<8x32xf32> to vector<8x32xbf16>
    %15 = vector.extract_strided_slice %14 {offsets = [0, 0], sizes = [8, 8], strides = [1, 1]} : vector<8x32xbf16> to vector<8x8xbf16>
    %c0_6 = arith.constant 0 : index
    %c0_7 = arith.constant 0 : index
    %c0_8 = arith.constant 0 : index
    %16 = vector.load %arg24[%c0_6, %c0_7, %c0_8] : memref<4x8x8xbf16, #tpu.memory_space<vmem>>, vector<1x8x8xbf16>
    %17 = vector.shape_cast %16 : vector<1x8x8xbf16> to vector<8x8xbf16>
    %18 = vector.shape_cast %15 : vector<8x8xbf16> to vector<1x8x8xbf16>
    tpu.vector_store %arg24[%c0_6, %c0_7, %c0_8], %18 {strides = array<i32>} : memref<4x8x8xbf16, #tpu.memory_space<vmem>>, vector<1x8x8xbf16>,
    %19 = vector.extract_strided_slice %14 {offsets = [0, 8], sizes = [8, 8], strides = [1, 1]} : vector<8x32xbf16> to vector<8x8xbf16>
    %c1 = arith.constant 1 : index
    %c0_9 = arith.constant 0 : index
    %c0_10 = arith.constant 0 : index
    %20 = vector.load %arg24[%c1, %c0_9, %c0_10] : memref<4x8x8xbf16, #tpu.memory_space<vmem>>, vector<1x8x8xbf16>
    %21 = vector.shape_cast %20 : vector<1x8x8xbf16> to vector<8x8xbf16>
    %22 = vector.shape_cast %19 : vector<8x8xbf16> to vector<1x8x8xbf16>
    tpu.vector_store %arg24[%c1, %c0_9, %c0_10], %22 {strides = array<i32>} : memref<4x8x8xbf16, #tpu.memory_space<vmem>>, vector<1x8x8xbf16>,
    %23 = vector.extract_strided_slice %14 {offsets = [0, 16], sizes = [8, 8], strides = [1, 1]} : vector<8x32xbf16> to vector<8x8xbf16>
    %c2 = arith.constant 2 : index
    %c0_11 = arith.constant 0 : index
    %c0_12 = arith.constant 0 : index
    %24 = vector.load %arg24[%c2, %c0_11, %c0_12] : memref<4x8x8xbf16, #tpu.memory_space<vmem>>, vector<1x8x8xbf16>
    %25 = vector.shape_cast %24 : vector<1x8x8xbf16> to vector<8x8xbf16>
    %26 = vector.shape_cast %23 : vector<8x8xbf16> to vector<1x8x8xbf16>
    tpu.vector_store %arg24[%c2, %c0_11, %c0_12], %26 {strides = array<i32>} : memref<4x8x8xbf16, #tpu.memory_space<vmem>>, vector<1x8x8xbf16>,
    %27 = vector.extract_strided_slice %14 {offsets = [0, 24], sizes = [8, 8], strides = [1, 1]} : vector<8x32xbf16> to vector<8x8xbf16>
    %c3 = arith.constant 3 : index
    %c0_13 = arith.constant 0 : index
    %c0_14 = arith.constant 0 : index
    %28 = vector.load %arg24[%c3, %c0_13, %c0_14] : memref<4x8x8xbf16, #tpu.memory_space<vmem>>, vector<1x8x8xbf16>
    %29 = vector.shape_cast %28 : vector<1x8x8xbf16> to vector<8x8xbf16>
    %30 = vector.shape_cast %27 : vector<8x8xbf16> to vector<1x8x8xbf16>
    tpu.vector_store %arg24[%c3, %c0_13, %c0_14], %30 {strides = array<i32>} : memref<4x8x8xbf16, #tpu.memory_space<vmem>>, vector<1x8x8xbf16>,
    %c0_15 = arith.constant 0 : index
    %c0_16 = arith.constant 0 : index
    %c0_17 = arith.constant 0 : index
    %31 = vector.load %arg24[%c0_15, %c0_16, %c0_17] : memref<4x8x8xbf16, #tpu.memory_space<vmem>>, vector<4x8x8xbf16>
    %cst_18 = arith.constant 0xFF800000 : f32
    %32 = vector.broadcast %cst_18 : f32 to vector<4x8x1xf32>
    %cst_19 = arith.constant 0.000000e+00 : f32
    %33 = vector.broadcast %cst_19 : f32 to vector<4x8x1xf32>
    %cst_20 = arith.constant 0.000000e+00 : f32
    %34 = vector.broadcast %cst_20 : f32 to vector<4x8x8xf32>
    %c0_i32_21 = arith.constant 0 : i32
    %35 = arith.index_cast %c0_i32_21 : i32 to index
    %c0_22 = arith.constant 0 : index
    %c0_23 = arith.constant 0 : index
    %c0_24 = arith.constant 0 : index
    %36 = vector.load %arg22[%35, %c0_22, %c0_23, %c0_24] : memref<1x4x8x8xbf16, #tpu.memory_space<vmem>>, vector<1x4x8x8xbf16>
    %37 = vector.shape_cast %36 : vector<1x4x8x8xbf16> to vector<4x8x8xbf16>
    %38 = arith.index_cast %c0_i32_21 : i32 to index
    %c0_25 = arith.constant 0 : index
    %c0_26 = arith.constant 0 : index
    %c0_27 = arith.constant 0 : index
    %39 = vector.load %arg23[%38, %c0_25, %c0_26, %c0_27] : memref<1x4x8x8xbf16, #tpu.memory_space<vmem>>, vector<1x4x8x8xbf16>
    %40 = vector.shape_cast %39 : vector<1x4x8x8xbf16> to vector<4x8x8xbf16>
    "tpu.trace_start"() <{level = 10 : i32, message = "htd,hsd->hts"}> : () -> ()
    %cst_28 = arith.constant dense<0.000000e+00> : vector<4x8x8xf32>
    %41 = tpu.matmul %31, %37, %cst_28 {dimension_numbers = #tpu.dot_dimension_numbers<[2], [2], [1], [1], [0, 0, 0, 1, 1, 1], [0], [0]>} : vector<4x8x8xbf16>, vector<4x8x8xbf16>, vector<4x8x8xf32> -> vector<4x8x8xf32>
    "tpu.trace_stop"() : () -> ()
    %cst_29 = arith.constant dense<0xFF800000> : vector<4x8xf32>
    %42 = vector.multi_reduction <maximumf>, %41, %cst_29 [2] : vector<4x8x8xf32> to vector<4x8xf32>
    %43 = vector.shape_cast %42 : vector<4x8xf32> to vector<4x8x1xf32>
    %44 = arith.maximumf %32, %43 : vector<4x8x1xf32>
    %45 = arith.subf %32, %44 : vector<4x8x1xf32>
    %46 = math.exp %45 : vector<4x8x1xf32>
    %47 = vector.broadcast %44 : vector<4x8x1xf32> to vector<4x8x8xf32>
    %48 = arith.subf %41, %47 : vector<4x8x8xf32>
    %49 = math.exp %48 : vector<4x8x8xf32>
    %50 = arith.mulf %46, %33 : vector<4x8x1xf32>
    %cst_30 = arith.constant dense<0.000000e+00> : vector<4x8xf32>
    %51 = vector.multi_reduction <add>, %49, %cst_30 [2] : vector<4x8x8xf32> to vector<4x8xf32>
    %52 = vector.shape_cast %51 : vector<4x8xf32> to vector<4x8x1xf32>
    %53 = arith.addf %50, %52 : vector<4x8x1xf32>
    %54 = vector.broadcast %46 : vector<4x8x1xf32> to vector<4x8x8xf32>
    %55 = arith.mulf %54, %34 : vector<4x8x8xf32>
    %56 = arith.truncf %49 : vector<4x8x8xf32> to vector<4x8x8xbf16>
    "tpu.trace_start"() <{level = 10 : i32, message = "hts,hsd->htd"}> : () -> ()
    %cst_31 = arith.constant dense<0.000000e+00> : vector<4x8x8xf32>
    %57 = tpu.matmul %56, %40, %cst_31 {dimension_numbers = #tpu.dot_dimension_numbers<[2], [1], [1], [2], [0, 0, 0, 1, 1, 2], [0], [0]>} : vector<4x8x8xbf16>, vector<4x8x8xbf16>, vector<4x8x8xf32> -> vector<4x8x8xf32>
    "tpu.trace_stop"() : () -> ()
    %58 = arith.addf %55, %57 : vector<4x8x8xf32>
    %c1_i32 = arith.constant 1 : i32
    %59 = tpu.reciprocal %53 {approx = true} : vector<4x8x1xf32> -> vector<4x8x1xf32>
    %60 = vector.broadcast %59 : vector<4x8x1xf32> to vector<4x8x8xf32>
    %61 = arith.mulf %58, %60 : vector<4x8x8xf32>
    %62 = vector.extract_strided_slice %61 {offsets = [0, 0, 0], sizes = [1, 8, 8], strides = [1, 1, 1]} : vector<4x8x8xf32> to vector<1x8x8xf32>
    %63 = vector.shape_cast %62 : vector<1x8x8xf32> to vector<8x8xf32>
    %c0_32 = arith.constant 0 : index
    %c0_33 = arith.constant 0 : index
    %64 = vector.load %arg25[%c0_32, %c0_33] : memref<8x32xf32, #tpu.memory_space<vmem>>, vector<8x8xf32>
    tpu.vector_store %arg25[%c0_32, %c0_33], %63 {strides = array<i32>} : memref<8x32xf32, #tpu.memory_space<vmem>>, vector<8x8xf32>,
    %65 = vector.extract_strided_slice %61 {offsets = [1, 0, 0], sizes = [1, 8, 8], strides = [1, 1, 1]} : vector<4x8x8xf32> to vector<1x8x8xf32>
    %66 = vector.shape_cast %65 : vector<1x8x8xf32> to vector<8x8xf32>
    %c0_34 = arith.constant 0 : index
    %c8 = arith.constant 8 : index
    %67 = vector.load %arg25[%c0_34, %c8] : memref<8x32xf32, #tpu.memory_space<vmem>>, vector<8x8xf32>
    tpu.vector_store %arg25[%c0_34, %c8], %66 {strides = array<i32>} : memref<8x32xf32, #tpu.memory_space<vmem>>, vector<8x8xf32>,
    %68 = vector.extract_strided_slice %61 {offsets = [2, 0, 0], sizes = [1, 8, 8], strides = [1, 1, 1]} : vector<4x8x8xf32> to vector<1x8x8xf32>
    %69 = vector.shape_cast %68 : vector<1x8x8xf32> to vector<8x8xf32>
    %c0_35 = arith.constant 0 : index
    %c16 = arith.constant 16 : index
    %70 = vector.load %arg25[%c0_35, %c16] : memref<8x32xf32, #tpu.memory_space<vmem>>, vector<8x8xf32>
    tpu.vector_store %arg25[%c0_35, %c16], %69 {strides = array<i32>} : memref<8x32xf32, #tpu.memory_space<vmem>>, vector<8x8xf32>,
    %71 = vector.extract_strided_slice %61 {offsets = [3, 0, 0], sizes = [1, 8, 8], strides = [1, 1, 1]} : vector<4x8x8xf32> to vector<1x8x8xf32>
    %72 = vector.shape_cast %71 : vector<1x8x8xf32> to vector<8x8xf32>
    %c0_36 = arith.constant 0 : index
    %c24 = arith.constant 24 : index
    %73 = vector.load %arg25[%c0_36, %c24] : memref<8x32xf32, #tpu.memory_space<vmem>>, vector<8x8xf32>
    tpu.vector_store %arg25[%c0_36, %c24], %72 {strides = array<i32>} : memref<8x32xf32, #tpu.memory_space<vmem>>, vector<8x8xf32>,
    %c0_37 = arith.constant 0 : index
    %c0_38 = arith.constant 0 : index
    %74 = vector.load %arg25[%c0_37, %c0_38] : memref<8x32xf32, #tpu.memory_space<vmem>>, vector<8x32xf32>
    %75 = arith.truncf %74 : vector<8x32xf32> to vector<8x32xbf16>
    %c0_39 = arith.constant 0 : index
    %c0_40 = arith.constant 0 : index
    %76 = vector.load %arg10[%c0_39, %c0_40] : memref<32x32xbf16, #tpu.memory_space<vmem>>, vector<32x32xbf16>
    %cst_41 = arith.constant dense<0.000000e+00> : vector<8x32xf32>
    %77 = tpu.matmul %75, %76, %cst_41 {dimension_numbers = #tpu.dot_dimension_numbers<[1], [0], [0], [1], [0, 0, 1, 1], [], []>} : vector<8x32xbf16>, vector<32x32xbf16>, vector<8x32xf32> -> vector<8x32xf32>
    %c0_42 = arith.constant 0 : index
    %c0_43 = arith.constant 0 : index
    %78 = vector.load %arg11[%c0_42, %c0_43] : memref<1x32xf32, #tpu.memory_space<vmem>>, vector<1x32xf32>
    %79 = vector.broadcast %78 : vector<1x32xf32> to vector<8x32xf32>
    %80 = arith.addf %77, %79 : vector<8x32xf32>
    %81 = arith.addf %7, %80 : vector<8x32xf32>
    %cst_44 = arith.constant dense<0.000000e+00> : vector<8xf32>
    %82 = vector.multi_reduction <add>, %81, %cst_44 [1] : vector<8x32xf32> to vector<8xf32>
    %83 = vector.shape_cast %82 : vector<8xf32> to vector<8x1xf32>
    %cst_45 = arith.constant 3.200000e+01 : f32
    %84 = vector.broadcast %cst_45 : f32 to vector<8x1xf32>
    %85 = arith.divf %83, %84 : vector<8x1xf32>
    %86 = vector.broadcast %85 : vector<8x1xf32> to vector<8x32xf32>
    %87 = arith.subf %81, %86 : vector<8x32xf32>
    %88 = arith.mulf %87, %87 : vector<8x32xf32>
    %cst_46 = arith.constant dense<0.000000e+00> : vector<8xf32>
    %89 = vector.multi_reduction <add>, %88, %cst_46 [1] : vector<8x32xf32> to vector<8xf32>
    %90 = vector.shape_cast %89 : vector<8xf32> to vector<8x1xf32>
    %cst_47 = arith.constant 3.200000e+01 : f32
    %91 = vector.broadcast %cst_47 : f32 to vector<8x1xf32>
    %92 = arith.divf %90, %91 : vector<8x1xf32>
    %93 = vector.broadcast %85 : vector<8x1xf32> to vector<8x32xf32>
    %94 = arith.subf %81, %93 : vector<8x32xf32>
    %cst_48 = arith.constant 9.99999974E-6 : f32
    %95 = vector.broadcast %cst_48 : f32 to vector<8x1xf32>
    %96 = arith.addf %92, %95 : vector<8x1xf32>
    %97 = math.rsqrt %96 : vector<8x1xf32>
    %98 = vector.broadcast %97 : vector<8x1xf32> to vector<8x32xf32>
    %99 = arith.mulf %94, %98 : vector<8x32xf32>
    %c0_49 = arith.constant 0 : index
    %c0_50 = arith.constant 0 : index
    %100 = vector.load %arg16[%c0_49, %c0_50] : memref<1x32xf32, #tpu.memory_space<vmem>>, vector<1x32xf32>
    %101 = vector.broadcast %100 : vector<1x32xf32> to vector<8x32xf32>
    %102 = arith.mulf %99, %101 : vector<8x32xf32>
    %c0_51 = arith.constant 0 : index
    %c0_52 = arith.constant 0 : index
    %103 = vector.load %arg17[%c0_51, %c0_52] : memref<1x32xf32, #tpu.memory_space<vmem>>, vector<1x32xf32>
    %104 = vector.broadcast %103 : vector<1x32xf32> to vector<8x32xf32>
    %105 = arith.addf %102, %104 : vector<8x32xf32>
    %106 = arith.truncf %105 : vector<8x32xf32> to vector<8x32xbf16>
    %c0_53 = arith.constant 0 : index
    %c0_54 = arith.constant 0 : index
    %107 = vector.load %arg12[%c0_53, %c0_54] : memref<32x64xbf16, #tpu.memory_space<vmem>>, vector<32x64xbf16>
    %cst_55 = arith.constant dense<0.000000e+00> : vector<8x64xf32>
    %108 = tpu.matmul %106, %107, %cst_55 {dimension_numbers = #tpu.dot_dimension_numbers<[1], [0], [0], [1], [0, 0, 1, 1], [], []>} : vector<8x32xbf16>, vector<32x64xbf16>, vector<8x64xf32> -> vector<8x64xf32>
    %c0_56 = arith.constant 0 : index
    %c0_57 = arith.constant 0 : index
    %109 = vector.load %arg13[%c0_56, %c0_57] : memref<1x64xf32, #tpu.memory_space<vmem>>, vector<1x64xf32>
    %110 = vector.broadcast %109 : vector<1x64xf32> to vector<8x64xf32>
    %111 = arith.addf %108, %110 : vector<8x64xf32>
    %c0_58 = arith.constant 0 : index
    %c0_59 = arith.constant 0 : index
    %c0_60 = arith.constant 0 : index
    %112 = vector.load %arg21[%c0_58, %c0_59, %c0_60] : memref<1x8x64xf32, #tpu.memory_space<vmem>>, vector<1x8x64xf32>
    %113 = vector.shape_cast %112 : vector<1x8x64xf32> to vector<8x64xf32>
    %114 = vector.shape_cast %111 : vector<8x64xf32> to vector<1x8x64xf32>
    tpu.vector_store %arg21[%c0_58, %c0_59, %c0_60], %114 {strides = array<i32>} : memref<1x8x64xf32, #tpu.memory_space<vmem>>, vector<1x8x64xf32>,
    %cst_61 = arith.constant 0.000000e+00 : f32
    %115 = vector.broadcast %cst_61 : f32 to vector<8x64xf32>
    %116 = arith.maximumf %111, %115 : vector<8x64xf32>
    %117 = arith.truncf %116 : vector<8x64xf32> to vector<8x64xbf16>
    %c0_62 = arith.constant 0 : index
    %c0_63 = arith.constant 0 : index
    %118 = vector.load %arg14[%c0_62, %c0_63] : memref<64x32xbf16, #tpu.memory_space<vmem>>, vector<64x32xbf16>
    %cst_64 = arith.constant dense<0.000000e+00> : vector<8x32xf32>
    %119 = tpu.matmul %117, %118, %cst_64 {dimension_numbers = #tpu.dot_dimension_numbers<[1], [0], [0], [1], [0, 0, 1, 1], [], []>} : vector<8x64xbf16>, vector<64x32xbf16>, vector<8x32xf32> -> vector<8x32xf32>
    %c0_65 = arith.constant 0 : index
    %c0_66 = arith.constant 0 : index
    %120 = vector.load %arg15[%c0_65, %c0_66] : memref<1x32xf32, #tpu.memory_space<vmem>>, vector<1x32xf32>
    %121 = vector.broadcast %120 : vector<1x32xf32> to vector<8x32xf32>
    %122 = arith.addf %119, %121 : vector<8x32xf32>
    %123 = arith.addf %105, %122 : vector<8x32xf32>
    %cst_67 = arith.constant dense<0.000000e+00> : vector<8xf32>
    %124 = vector.multi_reduction <add>, %123, %cst_67 [1] : vector<8x32xf32> to vector<8xf32>
    %125 = vector.shape_cast %124 : vector<8xf32> to vector<8x1xf32>
    %cst_68 = arith.constant 3.200000e+01 : f32
    %126 = vector.broadcast %cst_68 : f32 to vector<8x1xf32>
    %127 = arith.divf %125, %126 : vector<8x1xf32>
    %128 = vector.broadcast %127 : vector<8x1xf32> to vector<8x32xf32>
    %129 = arith.subf %123, %128 : vector<8x32xf32>
    %130 = arith.mulf %129, %129 : vector<8x32xf32>
    %cst_69 = arith.constant dense<0.000000e+00> : vector<8xf32>
    %131 = vector.multi_reduction <add>, %130, %cst_69 [1] : vector<8x32xf32> to vector<8xf32>
    %132 = vector.shape_cast %131 : vector<8xf32> to vector<8x1xf32>
    %cst_70 = arith.constant 3.200000e+01 : f32
    %133 = vector.broadcast %cst_70 : f32 to vector<8x1xf32>
    %134 = arith.divf %132, %133 : vector<8x1xf32>
    %135 = vector.broadcast %127 : vector<8x1xf32> to vector<8x32xf32>
    %136 = arith.subf %123, %135 : vector<8x32xf32>
    %cst_71 = arith.constant 9.99999974E-6 : f32
    %137 = vector.broadcast %cst_71 : f32 to vector<8x1xf32>
    %138 = arith.addf %134, %137 : vector<8x1xf32>
    %139 = math.rsqrt %138 : vector<8x1xf32>
    %140 = vector.broadcast %139 : vector<8x1xf32> to vector<8x32xf32>
    %141 = arith.mulf %136, %140 : vector<8x32xf32>
    %c0_72 = arith.constant 0 : index
    %c0_73 = arith.constant 0 : index
    %142 = vector.load %arg18[%c0_72, %c0_73] : memref<1x32xf32, #tpu.memory_space<vmem>>, vector<1x32xf32>
    %143 = vector.broadcast %142 : vector<1x32xf32> to vector<8x32xf32>
    %144 = arith.mulf %141, %143 : vector<8x32xf32>
    %c0_74 = arith.constant 0 : index
    %c0_75 = arith.constant 0 : index
    %145 = vector.load %arg19[%c0_74, %c0_75] : memref<1x32xf32, #tpu.memory_space<vmem>>, vector<1x32xf32>
    %146 = vector.broadcast %145 : vector<1x32xf32> to vector<8x32xf32>
    %147 = arith.addf %144, %146 : vector<8x32xf32>
    %c0_76 = arith.constant 0 : index
    %c0_77 = arith.constant 0 : index
    %c0_78 = arith.constant 0 : index
    %148 = vector.load %arg20[%c0_76, %c0_77, %c0_78] : memref<1x8x32xf32, #tpu.memory_space<vmem>>, vector<1x8x32xf32>
    %149 = vector.shape_cast %148 : vector<1x8x32xf32> to vector<8x32xf32>
    %150 = vector.shape_cast %147 : vector<8x32xf32> to vector<1x8x32xf32>
    tpu.vector_store %arg20[%c0_76, %c0_77, %c0_78], %150 {strides = array<i32>} : memref<1x8x32xf32, #tpu.memory_space<vmem>>, vector<1x8x32xf32>,
    return
  }
  func.func @transform_0(%arg0: i32, %arg1: i32) -> (i32, i32, i32) {
    %c0_i32 = arith.constant 0 : i32
    %c0_i32_0 = arith.constant 0 : i32
    %c0_i32_1 = arith.constant 0 : i32
    return %arg0, %c0_i32, %c0_i32_0 : i32, i32, i32
  }
  func.func @transform_1(%arg0: i32, %arg1: i32) -> (i32, i32, i32) {
    %c0_i32 = arith.constant 0 : i32
    %c0_i32_0 = arith.constant 0 : i32
    %c0_i32_1 = arith.constant 0 : i32
    %c0_i32_2 = arith.constant 0 : i32
    return %c0_i32, %c0_i32_0, %c0_i32_1 : i32, i32, i32
  }
  func.func @transform_2(%arg0: i32, %arg1: i32) -> (i32, i32) {
    %c0_i32 = arith.constant 0 : i32
    %c0_i32_0 = arith.constant 0 : i32
    %c0_i32_1 = arith.constant 0 : i32
    return %c0_i32, %c0_i32_0 : i32, i32
  }
  func.func @transform_3(%arg0: i32, %arg1: i32) -> (i32, i32) {
    %c0_i32 = arith.constant 0 : i32
    %c0_i32_0 = arith.constant 0 : i32
    %c0_i32_1 = arith.constant 0 : i32
    return %c0_i32, %c0_i32_0 : i32, i32
  }
  func.func @transform_4(%arg0: i32, %arg1: i32) -> (i32, i32) {
    %c0_i32 = arith.constant 0 : i32
    %c0_i32_0 = arith.constant 0 : i32
    %c0_i32_1 = arith.constant 0 : i32
    return %c0_i32, %c0_i32_0 : i32, i32
  }
  func.func @transform_5(%arg0: i32, %arg1: i32) -> (i32, i32) {
    %c0_i32 = arith.constant 0 : i32
    %c0_i32_0 = arith.constant 0 : i32
    %c0_i32_1 = arith.constant 0 : i32
    return %c0_i32, %c0_i32_0 : i32, i32
  }
  func.func @transform_6(%arg0: i32, %arg1: i32) -> (i32, i32) {
    %c0_i32 = arith.constant 0 : i32
    %c0_i32_0 = arith.constant 0 : i32
    %c0_i32_1 = arith.constant 0 : i32
    return %c0_i32, %c0_i32_0 : i32, i32
  }
  func.func @transform_7(%arg0: i32, %arg1: i32) -> (i32, i32) {
    %c0_i32 = arith.constant 0 : i32
    %c0_i32_0 = arith.constant 0 : i32
    %c0_i32_1 = arith.constant 0 : i32
    return %c0_i32, %c0_i32_0 : i32, i32
  }
  func.func @transform_8(%arg0: i32, %arg1: i32) -> (i32, i32) {
    %c0_i32 = arith.constant 0 : i32
    %c0_i32_0 = arith.constant 0 : i32
    %c0_i32_1 = arith.constant 0 : i32
    return %c0_i32, %c0_i32_0 : i32, i32
  }
  func.func @transform_9(%arg0: i32, %arg1: i32) -> (i32, i32) {
    %c0_i32 = arith.constant 0 : i32
    %c0_i32_0 = arith.constant 0 : i32
    %c0_i32_1 = arith.constant 0 : i32
    return %c0_i32, %c0_i32_0 : i32, i32
  }
  func.func @transform_10(%arg0: i32, %arg1: i32) -> (i32, i32) {
    %c0_i32 = arith.constant 0 : i32
    %c0_i32_0 = arith.constant 0 : i32
    %c0_i32_1 = arith.constant 0 : i32
    return %c0_i32, %c0_i32_0 : i32, i32
  }
  func.func @transform_11(%arg0: i32, %arg1: i32) -> (i32, i32) {
    %c0_i32 = arith.constant 0 : i32
    %c0_i32_0 = arith.constant 0 : i32
    %c0_i32_1 = arith.constant 0 : i32
    return %c0_i32, %c0_i32_0 : i32, i32
  }
  func.func @transform_12(%arg0: i32, %arg1: i32) -> (i32, i32) {
    %c0_i32 = arith.constant 0 : i32
    %c0_i32_0 = arith.constant 0 : i32
    %c0_i32_1 = arith.constant 0 : i32
    return %c0_i32, %c0_i32_0 : i32, i32
  }
  func.func @transform_13(%arg0: i32, %arg1: i32) -> (i32, i32) {
    %c0_i32 = arith.constant 0 : i32
    %c0_i32_0 = arith.constant 0 : i32
    %c0_i32_1 = arith.constant 0 : i32
    return %c0_i32, %c0_i32_0 : i32, i32
  }
  func.func @transform_14(%arg0: i32, %arg1: i32) -> (i32, i32) {
    %c0_i32 = arith.constant 0 : i32
    %c0_i32_0 = arith.constant 0 : i32
    %c0_i32_1 = arith.constant 0 : i32
    return %c0_i32, %c0_i32_0 : i32, i32
  }
  func.func @transform_15(%arg0: i32, %arg1: i32) -> (i32, i32) {
    %c0_i32 = arith.constant 0 : i32
    %c0_i32_0 = arith.constant 0 : i32
    %c0_i32_1 = arith.constant 0 : i32
    return %c0_i32, %c0_i32_0 : i32, i32
  }
  func.func @transform_16(%arg0: i32, %arg1: i32) -> (i32, i32) {
    %c0_i32 = arith.constant 0 : i32
    %c0_i32_0 = arith.constant 0 : i32
    %c0_i32_1 = arith.constant 0 : i32
    return %c0_i32, %c0_i32_0 : i32, i32
  }
  func.func @transform_17(%arg0: i32, %arg1: i32) -> (i32, i32) {
    %c0_i32 = arith.constant 0 : i32
    %c0_i32_0 = arith.constant 0 : i32
    %c0_i32_1 = arith.constant 0 : i32
    return %c0_i32, %c0_i32_0 : i32, i32
  }
  func.func @transform_18(%arg0: i32, %arg1: i32) -> (i32, i32, i32) {
    %c0_i32 = arith.constant 0 : i32
    %c0_i32_0 = arith.constant 0 : i32
    return %arg0, %arg1, %c0_i32 : i32, i32, i32
  }
  func.func @transform_19(%arg0: i32, %arg1: i32) -> (i32, i32, i32) {
    %c0_i32 = arith.constant 0 : i32
    %c0_i32_0 = arith.constant 0 : i32
    return %arg0, %arg1, %c0_i32 : i32, i32, i32
  }
}

</mosaic_0001>

<llo_original>
// kernel: tpu_custom_call.1
$region0: #{tpu_custom_call.1}
  #allocation0 [shape = 'u32[]', space=smem, size = 0x4, offset = 0x4, fixed_abs, tag = 'smem constant byte address 0x4 - core index']
  #allocation1 [shape = 'u32[144,128]{1,0:T(1,128)}', space=vmem, size = 0x12000, scoped, tag = 'internal scratch']
  #allocation2 [shape = 'bf16[1,4,8,8]{3,2,1,0:T(8,128)(2,1)}', space=vmem, size = 0x2000, scoped, tag = 'scratch operand']
  #allocation3 [shape = 'bf16[1,4,8,8]{3,2,1,0:T(8,128)(2,1)}', space=vmem, size = 0x2000, scoped, tag = 'scratch operand']
  #allocation4 [shape = 'bf16[4,8,8]{2,1,0:T(8,128)(2,1)}', space=vmem, size = 0x2000, scoped, tag = 'scratch operand']
  #allocation5 [shape = 'f32[8,32]{1,0:T(8,128)}', space=vmem, size = 0x1000, scoped, tag = 'scratch operand']
  %s0 = inlined_call_operand.vmem [shape: f32[2,8,32], index: 0, kind: input, shape index: {}]
  %s1 = inlined_call_operand.vmem [shape: f32[1,1,8], index: 1, kind: input, shape index: {}]
  %s2 = inlined_call_operand.vmem [shape: bf16[32,32], index: 2, kind: input, shape index: {}]
  %s3 = inlined_call_operand.vmem [shape: f32[1,32], index: 3, kind: input, shape index: {}]
  %s4 = inlined_call_operand.vmem [shape: bf16[32,32], index: 4, kind: input, shape index: {}]
  %s5 = inlined_call_operand.hbm [shape: f32[1,32], index: 5, kind: input, shape index: {}]
  %s6 = inlined_call_operand.hbm [shape: bf16[32,32], index: 6, kind: input, shape index: {}]
  %s7 = inlined_call_operand.hbm [shape: f32[1,32], index: 7, kind: input, shape index: {}]
  %s8 = inlined_call_operand.hbm [shape: bf16[32,32], index: 8, kind: input, shape index: {}]
  %s9 = inlined_call_operand.hbm [shape: f32[1,32], index: 9, kind: input, shape index: {}]
  %s10 = inlined_call_operand.vmem [shape: bf16[32,64], index: 10, kind: input, shape index: {}]
  %s11 = inlined_call_operand.vmem [shape: f32[1,64], index: 11, kind: input, shape index: {}]
  %s12 = inlined_call_operand.vmem [shape: bf16[64,32], index: 12, kind: input, shape index: {}]
  %s13 = inlined_call_operand.vmem [shape: f32[1,32], index: 13, kind: input, shape index: {}]
  %s14 = inlined_call_operand.vmem [shape: f32[1,32], index: 14, kind: input, shape index: {}]
  %s15 = inlined_call_operand.vmem [shape: f32[1,32], index: 15, kind: input, shape index: {}]
  %s16 = inlined_call_operand.vmem [shape: f32[1,32], index: 16, kind: input, shape index: {}]
  %s17 = inlined_call_operand.vmem [shape: f32[1,32], index: 17, kind: input, shape index: {}]
  %s18 = inlined_call_operand.hbm [shape: f32[2,8,32], index: 18, kind: output, shape index: {0}]
  %s19 = inlined_call_operand.hbm [shape: f32[2,8,64], index: 19, kind: output, shape index: {1}]
  %20 = xla_tuple %s18, %s19
  %s21 = sld [smem:[#allocation0]]
  $region137: #{tpu_custom_call.1} parent=0
    _
  %s23 = ssub.s32 1, %s21
  %s24 = scalar_select 0, %s23, %s21
  $region1: #{tpu_custom_call.1} parent=0
    #allocation6 [shape = 'u8[512]{0}', space=vmem, size = 0x400, scoped, tag = 'input window, operand 5, single buffered']
    #allocation7 [shape = 's32[2]{0}', space=sflag, size = 0x8, scoped, tag = 'scoped memory for tpu_custom_call.1']
    #allocation8 [shape = 's32[2]{0}', space=sflag, size = 0x8, scoped, tag = 'scoped memory for tpu_custom_call.1']
    #allocation9 [shape = 'u8[8192]{0}', space=vmem, size = 0x2000, scoped, tag = 'input window, operand 6, single buffered']
    #allocation10 [shape = 's32[1]{0}', space=sflag, size = 0x4, scoped, tag = 'scoped memory for tpu_custom_call.1']
    #allocation11 [shape = 'u8[512]{0}', space=vmem, size = 0x400, scoped, tag = 'input window, operand 7, single buffered']
    #allocation12 [shape = 'u8[8192]{0}', space=vmem, size = 0x2000, scoped, tag = 'input window, operand 8, single buffered']
    #allocation13 [shape = 's32[1]{0}', space=sflag, size = 0x4, scoped, tag = 'scoped memory for tpu_custom_call.1']
    #allocation14 [shape = 'u8[512]{0}', space=vmem, size = 0x400, scoped, tag = 'input window, operand 9, single buffered']
    #allocation15 [shape = 'u8[8192]{0}', space=vmem, size = 0x2000, scoped, tag = 'output window, operand 0']
    #allocation16 [shape = 'u8[8192]{0}', space=vmem, size = 0x2000, scoped, tag = 'output window, operand 1']
    #allocation17 [shape = 's32[2]{0}', space=sflag, size = 0x8, scoped, tag = 'scoped memory for tpu_custom_call.1']
    %25 = vsyncpa [#allocation7], 0
    %26 = vsyncpa [#allocation10], 0
    %27 = vsyncpa [#allocation13], 0
    %28 = vsyncpa [#allocation8], 0
    %s29 = scalar_lea.sflag [#allocation8], 1
    %30 = vsyncpa %s29, 0
    %31 = vsyncpa [#allocation17], 0
    %s32 = scalar_lea.sflag [#allocation17], 1
    %33 = vsyncpa %s32, 0
    loop: start=0, step=1, limit=4
    $region2: #{tpu_custom_call.1} parent=1 // loop_pre_header
      _
    $region3: #{tpu_custom_call.1} parent=1 // loop_header
      %s35 = sphi 0, %s39
      %p36 = scmp.ge.s32.totalorder %s35, 4
      %s42 = sphi 0, %s54
      %s43 = sphi 0, %s50
      %s44 = sphi 0, %s42
      %s45 = sphi 0, %s43
      %s46 = sphi 0, %s44
      %s47 = sphi 0, %s45
      %s57 = sphi 0, %s59
      %s60 = sphi 0, %s57
      %s61 = sphi 0, %s60
      %s77 = sphi 0, %s61
      %s81 = sphi 0, %s81
      %s83 = sphi 0, %s81
      %s84 = sphi 0, %s83
      %s98 = sphi 0, %s84
      %s102 = sphi 0, %s102
      %s104 = sphi 0, %s102
      %s105 = sphi 0, %s104
      %s119 = sphi 0, %s105
      %s123 = sphi 0, %s123
      %s125 = sphi 0, %s123
      %s126 = sphi 0, %s125
      %s140 = sphi 0, %s126
      %s144 = sphi 0, %s144
      %s146 = sphi 0, %s144
      %s147 = sphi 0, %s146
      %s161 = sphi 0, %s147
      %s165 = sphi 0, %s165
      %s167 = sphi 0, %s165
      %s168 = sphi 0, %s167
      %s182 = sphi 0, %s168
      %s186 = sphi 0, %s186
      %s188 = sphi 0, %s186
      %s189 = sphi 0, %s188
      %s203 = sphi 0, %s189
      %s207 = sphi 0, %s207
      %s209 = sphi 0, %s207
      %s210 = sphi 0, %s209
      %s224 = sphi 0, %s210
      %s228 = sphi 0, %s228
      %s230 = sphi 0, %s228
      %s231 = sphi 0, %s230
      %s245 = sphi 0, %s231
      %s249 = sphi 0, %s249
      %s251 = sphi 0, %s249
      %s252 = sphi 0, %s251
      %s266 = sphi 0, %s252
      %s270 = sphi 0, %s270
      %s272 = sphi 0, %s270
      %s273 = sphi 0, %s272
      %s287 = sphi 0, %s273
      %s291 = sphi 0, %s291
      %s293 = sphi 0, %s291
      %s294 = sphi 0, %s293
      %s308 = sphi 0, %s294
      %s312 = sphi 0, %s312
      %s314 = sphi 0, %s312
      %s315 = sphi 0, %s314
      %s329 = sphi 0, %s315
      %s333 = sphi 0, %s333
      %s335 = sphi 0, %s333
      %s336 = sphi 0, %s335
      %s350 = sphi 0, %s336
      %s354 = sphi 0, %s354
      %s356 = sphi 0, %s354
      %s357 = sphi 0, %s356
      %s371 = sphi 0, %s357
      %s375 = sphi 0, %s375
      %s377 = sphi 0, %s375
      %s378 = sphi 0, %s377
      %s392 = sphi 0, %s378
      %s396 = sphi 0, %s396
      %s398 = sphi 0, %s396
      %s399 = sphi 0, %s398
      %s413 = sphi 0, %s399
      %s417 = sphi 0, %s417
      %s419 = sphi 0, %s417
      %s420 = sphi 0, %s419
      %s434 = sphi 0, %s420
      %s442 = sphi 0, %s444
      %s445 = sphi 0, %s442
      %s446 = sphi 0, %s445
      %s462 = sphi 0, %s446
      %s470 = sphi 0, %s472
      %s473 = sphi 0, %s470
      %s474 = sphi 0, %s473
      %s490 = sphi 0, %s474
    $region4: #{tpu_custom_call.1} parent=1 // loop_header_branch
      %38 = sbr.rel (%p36) target = $region8
    $region5: #{tpu_custom_call.1} parent=1 // loop_body
      %s40 = ssub.s32 %s35, 1
      %s41 = ssub.s32 %s35, 2
      %s48 = sadd.s32 1, %s43
      %p49 = scmp.ge.s32.totalorder %s48, 1
      %s50 = scalar_select %p49, 0, %s48
      %s51 = sadd.s32 1, %s42
      %s52 = scalar_select %p49, %s51, %s42
      %p53 = scmp.ge.s32.totalorder %s52, 2
      %s54 = scalar_select %p53, 0, %s52
      %s55 = ssub.s32 %s42, %s54
      %p56 = scmp.eq.s32.totalorder %s55, 0
      %s58 = sadd.s32 %s57, 1
      %s59 = scalar_select %p56, %s57, %s58
      %p62 = pneg %p56
      %p63 = scmp.eq.s32.totalorder %s35, 1
      %p64 = por %p62, %p63
      %p65 = scmp.ne.s32.totalorder %s57, %s60
      %p66 = scmp.eq.s32.totalorder %s35, 0
      %p67 = por %p65, %p66
      %p68 = scmp.ne.s32.totalorder %s57, %s60
      %p69 = scmp.eq.s32.totalorder %s40, 1
      %p70 = por %p68, %p69
      %p71 = scmp.ne.s32.totalorder %s60, %s61
      %p72 = scmp.eq.s32.totalorder %s40, 0
      %p73 = por %p71, %p72
      %p74 = scmp.ne.s32.totalorder %s60, %s61
      %p75 = scmp.eq.s32.totalorder %s41, 1
      %p76 = por %p74, %p75
      %p78 = scmp.ne.s32.totalorder %s61, %s77
      %p79 = scmp.eq.s32.totalorder %s41, 0
      %p80 = por %p78, %p79
      %s82 = sadd.s32 %s81, 1
      %p85 = scmp.eq.s32.totalorder %s35, 1
      %p86 = scmp.ne.s32.totalorder %s81, %s83
      %p87 = scmp.eq.s32.totalorder %s35, 0
      %p88 = por %p86, %p87
      %p89 = scmp.ne.s32.totalorder %s81, %s83
      %p90 = scmp.eq.s32.totalorder %s40, 1
      %p91 = por %p89, %p90
      %p92 = scmp.ne.s32.totalorder %s83, %s84
      %p93 = scmp.eq.s32.totalorder %s40, 0
      %p94 = por %p92, %p93
      %p95 = scmp.ne.s32.totalorder %s83, %s84
      %p96 = scmp.eq.s32.totalorder %s41, 1
      %p97 = por %p95, %p96
      %p99 = scmp.ne.s32.totalorder %s84, %s98
      %p100 = scmp.eq.s32.totalorder %s41, 0
      %p101 = por %p99, %p100
      %s103 = sadd.s32 %s102, 1
      %p106 = scmp.eq.s32.totalorder %s35, 1
      %p107 = scmp.ne.s32.totalorder %s102, %s104
      %p108 = scmp.eq.s32.totalorder %s35, 0
      %p109 = por %p107, %p108
      %p110 = scmp.ne.s32.totalorder %s102, %s104
      %p111 = scmp.eq.s32.totalorder %s40, 1
      %p112 = por %p110, %p111
      %p113 = scmp.ne.s32.totalorder %s104, %s105
      %p114 = scmp.eq.s32.totalorder %s40, 0
      %p115 = por %p113, %p114
      %p116 = scmp.ne.s32.totalorder %s104, %s105
      %p117 = scmp.eq.s32.totalorder %s41, 1
      %p118 = por %p116, %p117
      %p120 = scmp.ne.s32.totalorder %s105, %s119
      %p121 = scmp.eq.s32.totalorder %s41, 0
      %p122 = por %p120, %p121
      %s124 = sadd.s32 %s123, 1
      %p127 = scmp.eq.s32.totalorder %s35, 1
      %p128 = scmp.ne.s32.totalorder %s123, %s125
      %p129 = scmp.eq.s32.totalorder %s35, 0
      %p130 = por %p128, %p129
      %p131 = scmp.ne.s32.totalorder %s123, %s125
      %p132 = scmp.eq.s32.totalorder %s40, 1
      %p133 = por %p131, %p132
      %p134 = scmp.ne.s32.totalorder %s125, %s126
      %p135 = scmp.eq.s32.totalorder %s40, 0
      %p136 = por %p134, %p135
      %p137 = scmp.ne.s32.totalorder %s125, %s126
      %p138 = scmp.eq.s32.totalorder %s41, 1
      %p139 = por %p137, %p138
      %p141 = scmp.ne.s32.totalorder %s126, %s140
      %p142 = scmp.eq.s32.totalorder %s41, 0
      %p143 = por %p141, %p142
      %s145 = sadd.s32 %s144, 1
      %p148 = scmp.eq.s32.totalorder %s35, 1
      %p149 = scmp.ne.s32.totalorder %s144, %s146
      %p150 = scmp.eq.s32.totalorder %s35, 0
      %p151 = por %p149, %p150
      %p152 = scmp.ne.s32.totalorder %s144, %s146
      %p153 = scmp.eq.s32.totalorder %s40, 1
      %p154 = por %p152, %p153
      %p155 = scmp.ne.s32.totalorder %s146, %s147
      %p156 = scmp.eq.s32.totalorder %s40, 0
      %p157 = por %p155, %p156
      %p158 = scmp.ne.s32.totalorder %s146, %s147
      %p159 = scmp.eq.s32.totalorder %s41, 1
      %p160 = por %p158, %p159
      %p162 = scmp.ne.s32.totalorder %s147, %s161
      %p163 = scmp.eq.s32.totalorder %s41, 0
      %p164 = por %p162, %p163
      %s166 = sadd.s32 %s165, 1
      %p169 = scmp.eq.s32.totalorder %s35, 1
      %p170 = scmp.ne.s32.totalorder %s165, %s167
      %p171 = scmp.eq.s32.totalorder %s35, 0
      %p172 = por %p170, %p171
      %p173 = scmp.ne.s32.totalorder %s165, %s167
      %p174 = scmp.eq.s32.totalorder %s40, 1
      %p175 = por %p173, %p174
      %p176 = scmp.ne.s32.totalorder %s167, %s168
      %p177 = scmp.eq.s32.totalorder %s40, 0
      %p178 = por %p176, %p177
      %p179 = scmp.ne.s32.totalorder %s167, %s168
      %p180 = scmp.eq.s32.totalorder %s41, 1
      %p181 = por %p179, %p180
      %p183 = scmp.ne.s32.totalorder %s168, %s182
      %p184 = scmp.eq.s32.totalorder %s41, 0
      %p185 = por %p183, %p184
      %s187 = sadd.s32 %s186, 1
      %p190 = scmp.eq.s32.totalorder %s35, 1
      %p191 = scmp.ne.s32.totalorder %s186, %s188
      %p192 = scmp.eq.s32.totalorder %s35, 0
      %p193 = por %p191, %p192
      %p194 = scmp.ne.s32.totalorder %s186, %s188
      %p195 = scmp.eq.s32.totalorder %s40, 1
      %p196 = por %p194, %p195
      %p197 = scmp.ne.s32.totalorder %s188, %s189
      %p198 = scmp.eq.s32.totalorder %s40, 0
      %p199 = por %p197, %p198
      %p200 = scmp.ne.s32.totalorder %s188, %s189
      %p201 = scmp.eq.s32.totalorder %s41, 1
      %p202 = por %p200, %p201
      %p204 = scmp.ne.s32.totalorder %s189, %s203
      %p205 = scmp.eq.s32.totalorder %s41, 0
      %p206 = por %p204, %p205
      %s208 = sadd.s32 %s207, 1
      %p211 = scmp.eq.s32.totalorder %s35, 1
      %p212 = scmp.ne.s32.totalorder %s207, %s209
      %p213 = scmp.eq.s32.totalorder %s35, 0
      %p214 = por %p212, %p213
      %p215 = scmp.ne.s32.totalorder %s207, %s209
      %p216 = scmp.eq.s32.totalorder %s40, 1
      %p217 = por %p215, %p216
      %p218 = scmp.ne.s32.totalorder %s209, %s210
      %p219 = scmp.eq.s32.totalorder %s40, 0
      %p220 = por %p218, %p219
      %p221 = scmp.ne.s32.totalorder %s209, %s210
      %p222 = scmp.eq.s32.totalorder %s41, 1
      %p223 = por %p221, %p222
      %p225 = scmp.ne.s32.totalorder %s210, %s224
      %p226 = scmp.eq.s32.totalorder %s41, 0
      %p227 = por %p225, %p226
      %s229 = sadd.s32 %s228, 1
      %p232 = scmp.eq.s32.totalorder %s35, 1
      %p233 = scmp.ne.s32.totalorder %s228, %s230
      %p234 = scmp.eq.s32.totalorder %s35, 0
      %p235 = por %p233, %p234
      %p236 = scmp.ne.s32.totalorder %s228, %s230
      %p237 = scmp.eq.s32.totalorder %s40, 1
      %p238 = por %p236, %p237
      %p239 = scmp.ne.s32.totalorder %s230, %s231
      %p240 = scmp.eq.s32.totalorder %s40, 0
      %p241 = por %p239, %p240
      %p242 = scmp.ne.s32.totalorder %s230, %s231
      %p243 = scmp.eq.s32.totalorder %s41, 1
      %p244 = por %p242, %p243
      %p246 = scmp.ne.s32.totalorder %s231, %s245
      %p247 = scmp.eq.s32.totalorder %s41, 0
      %p248 = por %p246, %p247
      %s250 = sadd.s32 %s249, 1
      %p253 = scmp.eq.s32.totalorder %s35, 1
      %p254 = scmp.ne.s32.totalorder %s249, %s251
      %p255 = scmp.eq.s32.totalorder %s35, 0
      %p256 = por %p254, %p255
      %p257 = scmp.ne.s32.totalorder %s249, %s251
      %p258 = scmp.eq.s32.totalorder %s40, 1
      %p259 = por %p257, %p258
      %p260 = scmp.ne.s32.totalorder %s251, %s252
      %p261 = scmp.eq.s32.totalorder %s40, 0
      %p262 = por %p260, %p261
      %p263 = scmp.ne.s32.totalorder %s251, %s252
      %p264 = scmp.eq.s32.totalorder %s41, 1
      %p265 = por %p263, %p264
      %p267 = scmp.ne.s32.totalorder %s252, %s266
      %p268 = scmp.eq.s32.totalorder %s41, 0
      %p269 = por %p267, %p268
      %s271 = sadd.s32 %s270, 1
      %p274 = scmp.eq.s32.totalorder %s35, 1
      %p275 = scmp.ne.s32.totalorder %s270, %s272
      %p276 = scmp.eq.s32.totalorder %s35, 0
      %p277 = por %p275, %p276
      %p278 = scmp.ne.s32.totalorder %s270, %s272
      %p279 = scmp.eq.s32.totalorder %s40, 1
      %p280 = por %p278, %p279
      %p281 = scmp.ne.s32.totalorder %s272, %s273
      %p282 = scmp.eq.s32.totalorder %s40, 0
      %p283 = por %p281, %p282
      %p284 = scmp.ne.s32.totalorder %s272, %s273
      %p285 = scmp.eq.s32.totalorder %s41, 1
      %p286 = por %p284, %p285
      %p288 = scmp.ne.s32.totalorder %s273, %s287
      %p289 = scmp.eq.s32.totalorder %s41, 0
      %p290 = por %p288, %p289
      %s292 = sadd.s32 %s291, 1
      %p295 = scmp.eq.s32.totalorder %s35, 1
      %p296 = scmp.ne.s32.totalorder %s291, %s293
      %p297 = scmp.eq.s32.totalorder %s35, 0
      %p298 = por %p296, %p297
      %p299 = scmp.ne.s32.totalorder %s291, %s293
      %p300 = scmp.eq.s32.totalorder %s40, 1
      %p301 = por %p299, %p300
      %p302 = scmp.ne.s32.totalorder %s293, %s294
      %p303 = scmp.eq.s32.totalorder %s40, 0
      %p304 = por %p302, %p303
      %p305 = scmp.ne.s32.totalorder %s293, %s294
      %p306 = scmp.eq.s32.totalorder %s41, 1
      %p307 = por %p305, %p306
      %p309 = scmp.ne.s32.totalorder %s294, %s308
      %p310 = scmp.eq.s32.totalorder %s41, 0
      %p311 = por %p309, %p310
      %s313 = sadd.s32 %s312, 1
      %p316 = scmp.eq.s32.totalorder %s35, 1
      %p317 = scmp.ne.s32.totalorder %s312, %s314
      %p318 = scmp.eq.s32.totalorder %s35, 0
      %p319 = por %p317, %p318
      %p320 = scmp.ne.s32.totalorder %s312, %s314
      %p321 = scmp.eq.s32.totalorder %s40, 1
      %p322 = por %p320, %p321
      %p323 = scmp.ne.s32.totalorder %s314, %s315
      %p324 = scmp.eq.s32.totalorder %s40, 0
      %p325 = por %p323, %p324
      %p326 = scmp.ne.s32.totalorder %s314, %s315
      %p327 = scmp.eq.s32.totalorder %s41, 1
      %p328 = por %p326, %p327
      %p330 = scmp.ne.s32.totalorder %s315, %s329
      %p331 = scmp.eq.s32.totalorder %s41, 0
      %p332 = por %p330, %p331
      %s334 = sadd.s32 %s333, 1
      %p337 = scmp.eq.s32.totalorder %s35, 1
      %p338 = scmp.ne.s32.totalorder %s333, %s335
      %p339 = scmp.eq.s32.totalorder %s35, 0
      %p340 = por %p338, %p339
      %p341 = scmp.ne.s32.totalorder %s333, %s335
      %p342 = scmp.eq.s32.totalorder %s40, 1
      %p343 = por %p341, %p342
      %p344 = scmp.ne.s32.totalorder %s335, %s336
      %p345 = scmp.eq.s32.totalorder %s40, 0
      %p346 = por %p344, %p345
      %p347 = scmp.ne.s32.totalorder %s335, %s336
      %p348 = scmp.eq.s32.totalorder %s41, 1
      %p349 = por %p347, %p348
      %p351 = scmp.ne.s32.totalorder %s336, %s350
      %p352 = scmp.eq.s32.totalorder %s41, 0
      %p353 = por %p351, %p352
      %s355 = sadd.s32 %s354, 1
      %p358 = scmp.eq.s32.totalorder %s35, 1
      %p359 = scmp.ne.s32.totalorder %s354, %s356
      %p360 = scmp.eq.s32.totalorder %s35, 0
      %p361 = por %p359, %p360
      %p362 = scmp.ne.s32.totalorder %s354, %s356
      %p363 = scmp.eq.s32.totalorder %s40, 1
      %p364 = por %p362, %p363
      %p365 = scmp.ne.s32.totalorder %s356, %s357
      %p366 = scmp.eq.s32.totalorder %s40, 0
      %p367 = por %p365, %p366
      %p368 = scmp.ne.s32.totalorder %s356, %s357
      %p369 = scmp.eq.s32.totalorder %s41, 1
      %p370 = por %p368, %p369
      %p372 = scmp.ne.s32.totalorder %s357, %s371
      %p373 = scmp.eq.s32.totalorder %s41, 0
      %p374 = por %p372, %p373
      %s376 = sadd.s32 %s375, 1
      %p379 = scmp.eq.s32.totalorder %s35, 1
      %p380 = scmp.ne.s32.totalorder %s375, %s377
      %p381 = scmp.eq.s32.totalorder %s35, 0
      %p382 = por %p380, %p381
      %p383 = scmp.ne.s32.totalorder %s375, %s377
      %p384 = scmp.eq.s32.totalorder %s40, 1
      %p385 = por %p383, %p384
      %p386 = scmp.ne.s32.totalorder %s377, %s378
      %p387 = scmp.eq.s32.totalorder %s40, 0
      %p388 = por %p386, %p387
      %p389 = scmp.ne.s32.totalorder %s377, %s378
      %p390 = scmp.eq.s32.totalorder %s41, 1
      %p391 = por %p389, %p390
      %p393 = scmp.ne.s32.totalorder %s378, %s392
      %p394 = scmp.eq.s32.totalorder %s41, 0
      %p395 = por %p393, %p394
      %s397 = sadd.s32 %s396, 1
      %p400 = scmp.eq.s32.totalorder %s35, 1
      %p401 = scmp.ne.s32.totalorder %s396, %s398
      %p402 = scmp.eq.s32.totalorder %s35, 0
      %p403 = por %p401, %p402
      %p404 = scmp.ne.s32.totalorder %s396, %s398
      %p405 = scmp.eq.s32.totalorder %s40, 1
      %p406 = por %p404, %p405
      %p407 = scmp.ne.s32.totalorder %s398, %s399
      %p408 = scmp.eq.s32.totalorder %s40, 0
      %p409 = por %p407, %p408
      %p410 = scmp.ne.s32.totalorder %s398, %s399
      %p411 = scmp.eq.s32.totalorder %s41, 1
      %p412 = por %p410, %p411
      %p414 = scmp.ne.s32.totalorder %s399, %s413
      %p415 = scmp.eq.s32.totalorder %s41, 0
      %p416 = por %p414, %p415
      %s418 = sadd.s32 %s417, 1
      %p421 = scmp.eq.s32.totalorder %s35, 1
      %p422 = scmp.ne.s32.totalorder %s417, %s419
      %p423 = scmp.eq.s32.totalorder %s35, 0
      %p424 = por %p422, %p423
      %p425 = scmp.ne.s32.totalorder %s417, %s419
      %p426 = scmp.eq.s32.totalorder %s40, 1
      %p427 = por %p425, %p426
      %p428 = scmp.ne.s32.totalorder %s419, %s420
      %p429 = scmp.eq.s32.totalorder %s40, 0
      %p430 = por %p428, %p429
      %p431 = scmp.ne.s32.totalorder %s419, %s420
      %p432 = scmp.eq.s32.totalorder %s41, 1
      %p433 = por %p431, %p432
      %p435 = scmp.ne.s32.totalorder %s420, %s434
      %p436 = scmp.eq.s32.totalorder %s41, 0
      %p437 = por %p435, %p436
      %s438 = ssub.s32 %s42, %s54
      %s439 = ssub.s32 %s43, %s50
      %s440 = sor.u32 %s438, %s439
      %p441 = scmp.eq.s32.totalorder %s440, 0
      %s443 = sadd.s32 %s442, 1
      %s444 = scalar_select %p441, %s442, %s443
      %p447 = pneg %p441
      %p448 = scmp.eq.s32.totalorder %s35, 1
      %p449 = por %p447, %p448
      %p450 = scmp.ne.s32.totalorder %s442, %s445
      %p451 = scmp.eq.s32.totalorder %s35, 0
      %p452 = por %p450, %p451
      %p453 = scmp.ne.s32.totalorder %s442, %s445
      %p454 = scmp.eq.s32.totalorder %s40, 1
      %p455 = por %p453, %p454
      %p456 = scmp.ne.s32.totalorder %s445, %s446
      %p457 = scmp.eq.s32.totalorder %s40, 0
      %p458 = por %p456, %p457
      %p459 = scmp.ne.s32.totalorder %s445, %s446
      %p460 = scmp.eq.s32.totalorder %s41, 1
      %p461 = por %p459, %p460
      %p463 = scmp.ne.s32.totalorder %s446, %s462
      %p464 = scmp.eq.s32.totalorder %s41, 0
      %p465 = por %p463, %p464
      %s466 = ssub.s32 %s42, %s54
      %s467 = ssub.s32 %s43, %s50
      %s468 = sor.u32 %s466, %s467
      %p469 = scmp.eq.s32.totalorder %s468, 0
      %s471 = sadd.s32 %s470, 1
      %s472 = scalar_select %p469, %s470, %s471
      %p475 = pneg %p469
      %p476 = scmp.eq.s32.totalorder %s35, 1
      %p477 = por %p475, %p476
      %p478 = scmp.ne.s32.totalorder %s470, %s473
      %p479 = scmp.eq.s32.totalorder %s35, 0
      %p480 = por %p478, %p479
      %p481 = scmp.ne.s32.totalorder %s470, %s473
      %p482 = scmp.eq.s32.totalorder %s40, 1
      %p483 = por %p481, %p482
      %p484 = scmp.ne.s32.totalorder %s473, %s474
      %p485 = scmp.eq.s32.totalorder %s40, 0
      %p486 = por %p484, %p485
      %p487 = scmp.ne.s32.totalorder %s473, %s474
      %p488 = scmp.eq.s32.totalorder %s41, 1
      %p489 = por %p487, %p488
      %p491 = scmp.ne.s32.totalorder %s474, %s490
      %p492 = scmp.eq.s32.totalorder %s41, 0
      %p493 = por %p491, %p492
      %p494 = scmp.le.s32.totalorder 1, %s35
      %p495 = scmp.lt.s32.totalorder %s35, 3
      %p496 = pnand %p494, %p495
      %p497 = pneg %p496
      // Predicated region
      $region9: #{tpu_custom_call.1} parent=5 // pred_check
        _
      $region10: #{tpu_custom_call.1} parent=5 // pred_check_branch
        %499 = sbr.rel (%p496) target = $region12
      $region11: #{tpu_custom_call.1} parent=5 // pred_region
        %s500 = ssub.s32 %s35, 1
        // Predicated region
        $region13: #{tpu_custom_call.1} parent=11 // pred_check
          %p501 = pneg %p94
        $region14: #{tpu_custom_call.1} parent=11 // pred_check_branch
          %503 = sbr.rel (%p501) target = $region16
        $region15: #{tpu_custom_call.1} parent=11 // pred_region
          _
        $region16: #{tpu_custom_call.1} parent=11 // pred_fallthru
          _
        // Predicated region
        $region17: #{tpu_custom_call.1} parent=11 // pred_check
          %p504 = pneg %p115
        $region18: #{tpu_custom_call.1} parent=11 // pred_check_branch
          %506 = sbr.rel (%p504) target = $region20
        $region19: #{tpu_custom_call.1} parent=11 // pred_region
          _
        $region20: #{tpu_custom_call.1} parent=11 // pred_fallthru
          _
        // Predicated region
        $region21: #{tpu_custom_call.1} parent=11 // pred_check
          %p507 = pneg %p136
        $region22: #{tpu_custom_call.1} parent=11 // pred_check_branch
          %509 = sbr.rel (%p507) target = $region24
        $region23: #{tpu_custom_call.1} parent=11 // pred_region
          _
        $region24: #{tpu_custom_call.1} parent=11 // pred_fallthru
          _
        // Predicated region
        $region25: #{tpu_custom_call.1} parent=11 // pred_check
          %p510 = pneg %p157
        $region26: #{tpu_custom_call.1} parent=11 // pred_check_branch
          %512 = sbr.rel (%p510) target = $region28
        $region27: #{tpu_custom_call.1} parent=11 // pred_region
          _
        $region28: #{tpu_custom_call.1} parent=11 // pred_fallthru
          _
        // Predicated region
        $region29: #{tpu_custom_call.1} parent=11 // pred_check
          %p513 = pneg %p178
        $region30: #{tpu_custom_call.1} parent=11 // pred_check_branch
          %515 = sbr.rel (%p513) target = $region32
        $region31: #{tpu_custom_call.1} parent=11 // pred_region
          %s517 = ssub.s32 16, 16
          %518 = vsyncadd [#allocation7], %s517
          %s520 = sshll.u32 [#allocation6], 4
          %s521 = int_to_ptr.vmem [resolvable:$true] %s520
          %523 = dma.hbm_to_vmem [thread:$0]  %s5, 16, %s521, [#allocation7]
        $region32: #{tpu_custom_call.1} parent=11 // pred_fallthru
          _
        // Predicated region
        $region33: #{tpu_custom_call.1} parent=11 // pred_check
          %p524 = pneg %p199
        $region34: #{tpu_custom_call.1} parent=11 // pred_check_branch
          %526 = sbr.rel (%p524) target = $region36
        $region35: #{tpu_custom_call.1} parent=11 // pred_region
          %s528 = ssub.s32 256, 256
          %529 = vsyncadd [#allocation10], %s528
          %s530 = sshll.u32 [#allocation9], 4
          %s531 = int_to_ptr.vmem [resolvable:$true] %s530
          %536 = dma.hbm_to_vmem [thread:$0]  %s6, 256, %s531, [#allocation10], 64, 64, 4
        $region36: #{tpu_custom_call.1} parent=11 // pred_fallthru
          _
        // Predicated region
        $region37: #{tpu_custom_call.1} parent=11 // pred_check
          %p537 = pneg %p220
        $region38: #{tpu_custom_call.1} parent=11 // pred_check_branch
          %539 = sbr.rel (%p537) target = $region40
        $region39: #{tpu_custom_call.1} parent=11 // pred_region
          %s541 = ssub.s32 16, 16
          %542 = vsyncadd [#allocation10], %s541
          %s544 = sshll.u32 [#allocation11], 4
          %s545 = int_to_ptr.vmem [resolvable:$true] %s544
          %547 = dma.hbm_to_vmem [thread:$0]  %s7, 16, %s545, [#allocation10]
        $region40: #{tpu_custom_call.1} parent=11 // pred_fallthru
          _
        // Predicated region
        $region41: #{tpu_custom_call.1} parent=11 // pred_check
          %p548 = pneg %p241
        $region42: #{tpu_custom_call.1} parent=11 // pred_check_branch
          %550 = sbr.rel (%p548) target = $region44
        $region43: #{tpu_custom_call.1} parent=11 // pred_region
          %s552 = ssub.s32 256, 256
          %553 = vsyncadd [#allocation13], %s552
          %s554 = sshll.u32 [#allocation12], 4
          %s555 = int_to_ptr.vmem [resolvable:$true] %s554
          %560 = dma.hbm_to_vmem [thread:$0]  %s8, 256, %s555, [#allocation13], 64, 64, 4
        $region44: #{tpu_custom_call.1} parent=11 // pred_fallthru
          _
        // Predicated region
        $region45: #{tpu_custom_call.1} parent=11 // pred_check
          %p561 = pneg %p262
        $region46: #{tpu_custom_call.1} parent=11 // pred_check_branch
          %563 = sbr.rel (%p561) target = $region48
        $region47: #{tpu_custom_call.1} parent=11 // pred_region
          %s565 = ssub.s32 16, 16
          %566 = vsyncadd [#allocation13], %s565
          %s568 = sshll.u32 [#allocation14], 4
          %s569 = int_to_ptr.vmem [resolvable:$true] %s568
          %571 = dma.hbm_to_vmem [thread:$0]  %s9, 16, %s569, [#allocation13]
        $region48: #{tpu_custom_call.1} parent=11 // pred_fallthru
          _
        // Predicated region
        $region49: #{tpu_custom_call.1} parent=11 // pred_check
          %p572 = pneg %p283
        $region50: #{tpu_custom_call.1} parent=11 // pred_check_branch
          %574 = sbr.rel (%p572) target = $region52
        $region51: #{tpu_custom_call.1} parent=11 // pred_region
          _
        $region52: #{tpu_custom_call.1} parent=11 // pred_fallthru
          _
        // Predicated region
        $region53: #{tpu_custom_call.1} parent=11 // pred_check
          %p575 = pneg %p304
        $region54: #{tpu_custom_call.1} parent=11 // pred_check_branch
          %577 = sbr.rel (%p575) target = $region56
        $region55: #{tpu_custom_call.1} parent=11 // pred_region
          _
        $region56: #{tpu_custom_call.1} parent=11 // pred_fallthru
          _
        // Predicated region
        $region57: #{tpu_custom_call.1} parent=11 // pred_check
          %p578 = pneg %p325
        $region58: #{tpu_custom_call.1} parent=11 // pred_check_branch
          %580 = sbr.rel (%p578) target = $region60
        $region59: #{tpu_custom_call.1} parent=11 // pred_region
          _
        $region60: #{tpu_custom_call.1} parent=11 // pred_fallthru
          _
        // Predicated region
        $region61: #{tpu_custom_call.1} parent=11 // pred_check
          %p581 = pneg %p346
        $region62: #{tpu_custom_call.1} parent=11 // pred_check_branch
          %583 = sbr.rel (%p581) target = $region64
        $region63: #{tpu_custom_call.1} parent=11 // pred_region
          _
        $region64: #{tpu_custom_call.1} parent=11 // pred_fallthru
          _
        // Predicated region
        $region65: #{tpu_custom_call.1} parent=11 // pred_check
          %p584 = pneg %p367
        $region66: #{tpu_custom_call.1} parent=11 // pred_check_branch
          %586 = sbr.rel (%p584) target = $region68
        $region67: #{tpu_custom_call.1} parent=11 // pred_region
          _
        $region68: #{tpu_custom_call.1} parent=11 // pred_fallthru
          _
        // Predicated region
        $region69: #{tpu_custom_call.1} parent=11 // pred_check
          %p587 = pneg %p388
        $region70: #{tpu_custom_call.1} parent=11 // pred_check_branch
          %589 = sbr.rel (%p587) target = $region72
        $region71: #{tpu_custom_call.1} parent=11 // pred_region
          _
        $region72: #{tpu_custom_call.1} parent=11 // pred_fallthru
          _
        // Predicated region
        $region73: #{tpu_custom_call.1} parent=11 // pred_check
          %p590 = pneg %p409
        $region74: #{tpu_custom_call.1} parent=11 // pred_check_branch
          %592 = sbr.rel (%p590) target = $region76
        $region75: #{tpu_custom_call.1} parent=11 // pred_region
          _
        $region76: #{tpu_custom_call.1} parent=11 // pred_fallthru
          _
        // Predicated region
        $region77: #{tpu_custom_call.1} parent=11 // pred_check
          %p593 = pneg %p430
        $region78: #{tpu_custom_call.1} parent=11 // pred_check_branch
          %595 = sbr.rel (%p593) target = $region80
        $region79: #{tpu_custom_call.1} parent=11 // pred_region
          _
        $region80: #{tpu_custom_call.1} parent=11 // pred_fallthru
          _
      $region12: #{tpu_custom_call.1} parent=5 // pred_fallthru
        _
      %p596 = scmp.lt.s32.totalorder %s35, 2
      // Predicated region
      $region81: #{tpu_custom_call.1} parent=5 // pred_check
        %p597 = pneg %p596
      $region82: #{tpu_custom_call.1} parent=5 // pred_check_branch
        %599 = sbr.rel (%p597) target = $region84
      $region83: #{tpu_custom_call.1} parent=5 // pred_region
        // Predicated region
        $region85: #{tpu_custom_call.1} parent=83 // pred_check
          %p600 = pneg %p67
        $region86: #{tpu_custom_call.1} parent=83 // pred_check_branch
          %602 = sbr.rel (%p600) target = $region88
        $region87: #{tpu_custom_call.1} parent=83 // pred_region
          %p603 = scmp.lt.s32.totalorder %s42, 1
          %s604 = scalar_select %p603, %s42, 1
          %s605 = smul.addr %s604, 8
          %s606 = scalar_lea.vmem %s0, %s605
        $region88: #{tpu_custom_call.1} parent=83 // pred_fallthru
          _
      $region84: #{tpu_custom_call.1} parent=5 // pred_fallthru
        _
      %p607 = scmp.le.s32.totalorder 1, %s35
      %p608 = scmp.lt.s32.totalorder %s35, 3
      %p609 = pnand %p607, %p608
      %p610 = pneg %p609
      // Predicated region
      $region89: #{tpu_custom_call.1} parent=5 // pred_check
        _
      $region90: #{tpu_custom_call.1} parent=5 // pred_check_branch
        %612 = sbr.rel (%p609) target = $region92
      $region91: #{tpu_custom_call.1} parent=5 // pred_region
        %s613 = ssub.s32 %s35, 1
        // Predicated region
        $region93: #{tpu_custom_call.1} parent=91 // pred_check
          %p614 = pneg %p178
        $region94: #{tpu_custom_call.1} parent=91 // pred_check_branch
          %616 = sbr.rel (%p614) target = $region96
        $region95: #{tpu_custom_call.1} parent=91 // pred_region
          %617 = dma.done [#allocation7], 16
        $region96: #{tpu_custom_call.1} parent=91 // pred_fallthru
          _
        // Predicated region
        $region97: #{tpu_custom_call.1} parent=91 // pred_check
          %p618 = pneg %p199
        $region98: #{tpu_custom_call.1} parent=91 // pred_check_branch
          %620 = sbr.rel (%p618) target = $region100
        $region99: #{tpu_custom_call.1} parent=91 // pred_region
          %621 = dma.done [#allocation10], 256
        $region100: #{tpu_custom_call.1} parent=91 // pred_fallthru
          _
        // Predicated region
        $region101: #{tpu_custom_call.1} parent=91 // pred_check
          %p622 = pneg %p220
        $region102: #{tpu_custom_call.1} parent=91 // pred_check_branch
          %624 = sbr.rel (%p622) target = $region104
        $region103: #{tpu_custom_call.1} parent=91 // pred_region
          %625 = dma.done [#allocation10], 16
        $region104: #{tpu_custom_call.1} parent=91 // pred_fallthru
          _
        // Predicated region
        $region105: #{tpu_custom_call.1} parent=91 // pred_check
          %p626 = pneg %p241
        $region106: #{tpu_custom_call.1} parent=91 // pred_check_branch
          %628 = sbr.rel (%p626) target = $region108
        $region107: #{tpu_custom_call.1} parent=91 // pred_region
          %629 = dma.done [#allocation13], 256
        $region108: #{tpu_custom_call.1} parent=91 // pred_fallthru
          _
        // Predicated region
        $region109: #{tpu_custom_call.1} parent=91 // pred_check
          %p630 = pneg %p262
        $region110: #{tpu_custom_call.1} parent=91 // pred_check_branch
          %632 = sbr.rel (%p630) target = $region112
        $region111: #{tpu_custom_call.1} parent=91 // pred_region
          %633 = dma.done [#allocation13], 16
        $region112: #{tpu_custom_call.1} parent=91 // pred_fallthru
          _
        %p634 = scmp.lt.s32.totalorder %s44, 1
        %s635 = scalar_select %p634, %s44, 1
        %s636 = smul.addr %s635, 8
        %s637 = scalar_lea.vmem %s0, %s636
        %p638 = pneg %p73
        %p639 = pneg %p70
        %p640 = pneg %p94
        %p641 = pneg %p91
        %p642 = pneg %p115
        %p643 = pneg %p112
        %p644 = pneg %p136
        %p645 = pneg %p133
        %p646 = pneg %p157
        %p647 = pneg %p154
        %p648 = pneg %p178
        %p649 = pneg %p175
        %p650 = pneg %p199
        %p651 = pneg %p196
        %p652 = pneg %p220
        %p653 = pneg %p217
        %p654 = pneg %p241
        %p655 = pneg %p238
        %p656 = pneg %p262
        %p657 = pneg %p259
        %p658 = pneg %p283
        %p659 = pneg %p280
        %p660 = pneg %p304
        %p661 = pneg %p301
        %p662 = pneg %p325
        %p663 = pneg %p322
        %p664 = pneg %p346
        %p665 = pneg %p343
        %p666 = pneg %p367
        %p667 = pneg %p364
        %p668 = pneg %p388
        %p669 = pneg %p385
        %p670 = pneg %p409
        %p671 = pneg %p406
        %p672 = pneg %p430
        %p673 = pneg %p427
        %p674 = pneg %p458
        %p675 = pneg %p455
        %s676 = sand.u32 %s445, 1
        %s677 = scalar_lea.sflag [#allocation8], %s676
        %s678 = sand.u32 %s445, 1
        %s679 = smul.addr %s678, 8
        %s680 = scalar_lea.vmem [#allocation15], %s679
        %p681 = pneg %p486
        %p682 = pneg %p483
        %s683 = sand.u32 %s473, 1
        %s684 = scalar_lea.sflag [#allocation17], %s683
        %s685 = sand.u32 %s473, 1
        %s686 = smul.addr %s685, 8
        %s687 = scalar_lea.vmem [#allocation16], %s686
        %p688 = scmp.lt.s32.totalorder %s44, 1
        %s689 = scalar_select %p688, %s44, 1
        %s690 = smul.addr %s689, 8
        %s691 = scalar_lea.vmem %s0, %s690
        %p693 = scmp.eq.s32.totalorder %s45, 0
        // Predicated region
        $region113: #{tpu_custom_call.1} parent=91 // pred_check
          %p694 = pneg %p693
        $region114: #{tpu_custom_call.1} parent=91 // pred_check_branch
          %696 = sbr.rel (%p694) target = $region116
        $region115: #{tpu_custom_call.1} parent=91 // pred_region
          %v697 = vld [vmem:[%s691] sm:$0xff]
          %v698 = vpack.c.bf16 %v697, %v697
          %v699 = vld [vmem:[%s4] sm:$0xf]
          %v700 = vld [vmem:[%s4 + $0x4] sm:$0xf]
          %v701 = vld [vmem:[%s4 + $0x8] sm:$0xf]
          %v702 = vld [vmem:[%s4 + $0xc] sm:$0xf]
          %v703 = vld [vmem:[#allocation6] sm:$0x1]
          %v705 = vlaneseq
          %v706 = vshrl.u32 %v705, 7
          %v707 = vsub.s32 0, %v706
          %v708 = vrot.slane %v703, %v707
          %v714 = vunpack.c.l.b16 %v699
          %v715 = vunpack.c.l.b16 %v700
          %v716 = vunpack.c.l.b16 %v701
          %v717 = vunpack.c.l.b16 %v702
          %v718 = vpack.c.b16 %v715, %v714
          %v719 = vpack.c.b16 %v717, %v716
          %vm722 = vcmask 261120
          %v724 = vsel %vm722, %v698, 0
          %726 = vmatprep.subr.bf16.mxu0 0
          %727 = vmatpush1.bf16.msra.mxu0 %v718
          %728 = vmatprep.subr.bf16.mxu0 0
          %729 = vmatpush1.bf16.msra.mxu0 %v719
          %730 = vmatprep.subr.bf16.mxu0 0
          %731 = vmatpush1.bf16.msra.mxu0 0
          %732 = vmatprep.subr.bf16.mxu0 0
          %733 = vmatpush1.bf16.msra.mxu0 0
          %734 = vmatprep.subr.bf16.mxu0 0
          %735 = vmatpush1.bf16.msra.mxu0 0
          %736 = vmatprep.subr.bf16.mxu0 0
          %737 = vmatpush1.bf16.msra.mxu0 0
          %738 = vmatprep.subr.bf16.mxu0 0
          %739 = vmatpush1.bf16.msra.mxu0 0
          %740 = vmatprep.subr.bf16.mxu0 0
          %741 = vmatpush1.bf16.msra.mxu0 0
          %742 = vmatprep.subr.bf16.mxu0 0
          %743 = vmatpush1.bf16.msra.mxu0 0
          %744 = vmatprep.subr.bf16.mxu0 0
          %745 = vmatpush1.bf16.msra.mxu0 0
          %746 = vmatprep.subr.bf16.mxu0 0
          %747 = vmatpush1.bf16.msra.mxu0 0
          %748 = vmatprep.subr.bf16.mxu0 0
          %749 = vmatpush1.bf16.msra.mxu0 0
          %750 = vmatprep.subr.bf16.mxu0 0
          %751 = vmatpush1.bf16.msra.mxu0 0
          %752 = vmatprep.subr.bf16.mxu0 0
          %753 = vmatpush1.bf16.msra.mxu0 0
          %754 = vmatprep.subr.bf16.mxu0 0
          %755 = vmatpush1.bf16.msra.mxu0 0
          %756 = vmatprep.subr.bf16.mxu0 0
          %757 = vmatpush1.bf16.msra.mxu0 0
          %758 = vmatprep.mubr.bf16.mxu0 0
          %759 = vmatmul.mubr.bf16.gmra.mrb[0].mxu0 %v724
          %v760 = vpop.f32.mrb[0].mxu0
          %v761 = vadd.f32 %v708, %v760
          %v762 = vpop.f32.mrb[0].mxu0
          %v763 = vpop.f32.mrb[0].mxu0
          %v764 = vpop.f32.mrb[0].mxu0
          %765 = vdwg.mxu0
          %v766 = vld [vmem:[#allocation9] sm:$0xf]
          %v767 = vld [vmem:[#allocation9 + $0x4] sm:$0xf]
          %v768 = vld [vmem:[#allocation9 + $0x8] sm:$0xf]
          %v769 = vld [vmem:[#allocation9 + $0xc] sm:$0xf]
          %v770 = vld [vmem:[#allocation11] sm:$0x1]
          %v772 = vlaneseq
          %v773 = vshrl.u32 %v772, 7
          %v774 = vsub.s32 0, %v773
          %v775 = vrot.slane %v770, %v774
          %v781 = vunpack.c.l.b16 %v766
          %v782 = vunpack.c.l.b16 %v767
          %v783 = vunpack.c.l.b16 %v768
          %v784 = vunpack.c.l.b16 %v769
          %v785 = vpack.c.b16 %v782, %v781
          %v786 = vpack.c.b16 %v784, %v783
          %789 = vmatprep.subr.bf16.mxu0 0
          %790 = vmatpush1.bf16.msra.mxu0 %v785
          %791 = vmatprep.subr.bf16.mxu0 0
          %792 = vmatpush1.bf16.msra.mxu0 %v786
          %793 = vmatprep.subr.bf16.mxu0 0
          %794 = vmatpush1.bf16.msra.mxu0 0
          %795 = vmatprep.subr.bf16.mxu0 0
          %796 = vmatpush1.bf16.msra.mxu0 0
          %797 = vmatprep.subr.bf16.mxu0 0
          %798 = vmatpush1.bf16.msra.mxu0 0
          %799 = vmatprep.subr.bf16.mxu0 0
          %800 = vmatpush1.bf16.msra.mxu0 0
          %801 = vmatprep.subr.bf16.mxu0 0
          %802 = vmatpush1.bf16.msra.mxu0 0
          %803 = vmatprep.subr.bf16.mxu0 0
          %804 = vmatpush1.bf16.msra.mxu0 0
          %805 = vmatprep.subr.bf16.mxu0 0
          %806 = vmatpush1.bf16.msra.mxu0 0
          %807 = vmatprep.subr.bf16.mxu0 0
          %808 = vmatpush1.bf16.msra.mxu0 0
          %809 = vmatprep.subr.bf16.mxu0 0
          %810 = vmatpush1.bf16.msra.mxu0 0
          %811 = vmatprep.subr.bf16.mxu0 0
          %812 = vmatpush1.bf16.msra.mxu0 0
          %813 = vmatprep.subr.bf16.mxu0 0
          %814 = vmatpush1.bf16.msra.mxu0 0
          %815 = vmatprep.subr.bf16.mxu0 0
          %816 = vmatpush1.bf16.msra.mxu0 0
          %817 = vmatprep.subr.bf16.mxu0 0
          %818 = vmatpush1.bf16.msra.mxu0 0
          %819 = vmatprep.subr.bf16.mxu0 0
          %820 = vmatpush1.bf16.msra.mxu0 0
          %821 = vmatprep.mubr.bf16.mxu0 0
          %822 = vmatmul.mubr.bf16.gmra.mrb[0].mxu0 %v724
          %v823 = vpop.f32.mrb[0].mxu0
          %v824 = vadd.f32 %v775, %v823
          %v825 = vpop.f32.mrb[0].mxu0
          %v826 = vpop.f32.mrb[0].mxu0
          %v827 = vpop.f32.mrb[0].mxu0
          %828 = vdwg.mxu0
          %v829 = vpack.c.bf16 %v761, %v761
          %v830 = vpack.c.bf16 %v824, %v824
          %vm831 = vcmask 60416
          %832 = vst.msk [vmem:[#allocation2] sm:$0xf] %vm831, %v829
          %833 = vst.msk [vmem:[#allocation3] sm:$0xf] %vm831, %v830
          %v835 = vunpack.c.l.b16 %v829
          %v836 = vpack.c.b16 %v835, %v835
          %837 = vrot.lane.b32.xlu0 %v836, 120
          %v838 = vpop.permute.xlu0 %837
          %s840 = scalar_lea.vmem [#allocation2], 4
          %841 = vst.msk [vmem:[%s840] sm:$0xf] %vm831, %v838
          %v843 = vunpack.c.l.b16 %v830
          %v844 = vpack.c.b16 %v843, %v843
          %845 = vrot.lane.b32.xlu0 %v844, 120
          %v846 = vpop.permute.xlu0 %845
          %s848 = scalar_lea.vmem [#allocation3], 4
          %849 = vst.msk [vmem:[%s848] sm:$0xf] %vm831, %v846
          %850 = vrot.lane.b32.xlu0 %v836, 112
          %v851 = vpop.permute.xlu0 %850
          %s853 = scalar_lea.vmem [#allocation2], 8
          %854 = vst.msk [vmem:[%s853] sm:$0xf] %vm831, %v851
          %855 = vrot.lane.b32.xlu0 %v844, 112
          %v856 = vpop.permute.xlu0 %855
          %s858 = scalar_lea.vmem [#allocation3], 8
          %859 = vst.msk [vmem:[%s858] sm:$0xf] %vm831, %v856
          %860 = vrot.lane.b32.xlu0 %v836, 104
          %v861 = vpop.permute.xlu0 %860
          %s863 = scalar_lea.vmem [#allocation2], 12
          %864 = vst.msk [vmem:[%s863] sm:$0xf] %vm831, %v861
          %865 = vrot.lane.b32.xlu0 %v844, 104
          %v866 = vpop.permute.xlu0 %865
          %s868 = scalar_lea.vmem [#allocation3], 12
          %869 = vst.msk [vmem:[%s868] sm:$0xf] %vm831, %v866
        $region116: #{tpu_custom_call.1} parent=91 // pred_fallthru
          _
        %s870 = smul.u32 %s45, 8
        %s871 = scalar_lea.vmem %s691, %s870
        %v872 = vld [vmem:[%s871] sm:$0xff]
        %v873 = vpack.c.bf16 %v872, %v872
        %v874 = vld [vmem:[%s2] sm:$0xf]
        %v875 = vld [vmem:[%s2 + $0x4] sm:$0xf]
        %v876 = vld [vmem:[%s2 + $0x8] sm:$0xf]
        %v877 = vld [vmem:[%s2 + $0xc] sm:$0xf]
        %v878 = vld [vmem:[%s3] sm:$0x1]
        %v880 = vlaneseq
        %v881 = vshrl.u32 %v880, 7
        %v882 = vsub.s32 0, %v881
        %v883 = vrot.slane %v878, %v882
        %v889 = vunpack.c.l.b16 %v874
        %v890 = vunpack.c.l.b16 %v875
        %v891 = vunpack.c.l.b16 %v876
        %v892 = vunpack.c.l.b16 %v877
        %v893 = vpack.c.b16 %v890, %v889
        %v894 = vpack.c.b16 %v892, %v891
        %vm897 = vcmask 261120
        %v899 = vsel %vm897, %v873, 0
        %901 = vmatprep.subr.bf16.mxu0 0
        %902 = vmatpush1.bf16.msra.mxu0 %v893
        %903 = vmatprep.subr.bf16.mxu0 0
        %904 = vmatpush1.bf16.msra.mxu0 %v894
        %905 = vmatprep.subr.bf16.mxu0 0
        %906 = vmatpush1.bf16.msra.mxu0 0
        %907 = vmatprep.subr.bf16.mxu0 0
        %908 = vmatpush1.bf16.msra.mxu0 0
        %909 = vmatprep.subr.bf16.mxu0 0
        %910 = vmatpush1.bf16.msra.mxu0 0
        %911 = vmatprep.subr.bf16.mxu0 0
        %912 = vmatpush1.bf16.msra.mxu0 0
        %913 = vmatprep.subr.bf16.mxu0 0
        %914 = vmatpush1.bf16.msra.mxu0 0
        %915 = vmatprep.subr.bf16.mxu0 0
        %916 = vmatpush1.bf16.msra.mxu0 0
        %917 = vmatprep.subr.bf16.mxu0 0
        %918 = vmatpush1.bf16.msra.mxu0 0
        %919 = vmatprep.subr.bf16.mxu0 0
        %920 = vmatpush1.bf16.msra.mxu0 0
        %921 = vmatprep.subr.bf16.mxu0 0
        %922 = vmatpush1.bf16.msra.mxu0 0
        %923 = vmatprep.subr.bf16.mxu0 0
        %924 = vmatpush1.bf16.msra.mxu0 0
        %925 = vmatprep.subr.bf16.mxu0 0
        %926 = vmatpush1.bf16.msra.mxu0 0
        %927 = vmatprep.subr.bf16.mxu0 0
        %928 = vmatpush1.bf16.msra.mxu0 0
        %929 = vmatprep.subr.bf16.mxu0 0
        %930 = vmatpush1.bf16.msra.mxu0 0
        %931 = vmatprep.subr.bf16.mxu0 0
        %932 = vmatpush1.bf16.msra.mxu0 0
        %933 = vmatprep.mubr.bf16.mxu0 0
        %934 = vmatmul.mubr.bf16.gmra.mrb[0].mxu0 %v899
        %v935 = vpop.f32.mrb[0].mxu0
        %v936 = vadd.f32 %v883, %v935
        %v937 = vpop.f32.mrb[0].mxu0
        %v938 = vpop.f32.mrb[0].mxu0
        %v939 = vpop.f32.mrb[0].mxu0
        %940 = vdwg.mxu0
        %v941 = vpack.c.bf16 %v936, %v936
        %vm942 = vcmask 60416
        %943 = vst.msk [vmem:[#allocation4] sm:$0xf] %vm942, %v941
        %v945 = vunpack.c.l.b16 %v941
        %v946 = vpack.c.b16 %v945, %v945
        %947 = vrot.lane.b32.xlu0 %v946, 120
        %v948 = vpop.permute.xlu0 %947
        %s950 = scalar_lea.vmem [#allocation4], 4
        %951 = vst.msk [vmem:[%s950] sm:$0xf] %vm942, %v948
        %952 = vrot.lane.b32.xlu0 %v946, 112
        %v953 = vpop.permute.xlu0 %952
        %s955 = scalar_lea.vmem [#allocation4], 8
        %956 = vst.msk [vmem:[%s955] sm:$0xf] %vm942, %v953
        %957 = vrot.lane.b32.xlu0 %v946, 104
        %v958 = vpop.permute.xlu0 %957
        %s960 = scalar_lea.vmem [#allocation4], 12
        %961 = vst.msk [vmem:[%s960] sm:$0xf] %vm942, %v958
        %v962 = vld [vmem:[#allocation4] sm:$0xf]
        %v963 = vld [vmem:[#allocation4 + $0x4] sm:$0xf]
        %v964 = vld [vmem:[#allocation4 + $0x8] sm:$0xf]
        %v965 = vld [vmem:[#allocation4 + $0xc] sm:$0xf]
        %v966 = vld [vmem:[#allocation2] sm:$0xf]
        %v967 = vld [vmem:[#allocation2 + $0x4] sm:$0xf]
        %v968 = vld [vmem:[#allocation2 + $0x8] sm:$0xf]
        %v969 = vld [vmem:[#allocation2 + $0xc] sm:$0xf]
        %v970 = vld [vmem:[#allocation3] sm:$0xf]
        %v971 = vld [vmem:[#allocation3 + $0x4] sm:$0xf]
        %v972 = vld [vmem:[#allocation3 + $0x8] sm:$0xf]
        %v973 = vld [vmem:[#allocation3 + $0xc] sm:$0xf]
        %vm974 = vcmask 64512
        %v976 = vsel %vm974, %v962, 0
        %v979 = vsel %vm974, %v966, 0
        %981 = vmatprep.subr.bf16.mxu0 0
        %982 = vmatpush1.bf16.xpose.msra.mxu0 %v979
        %983 = vmatprep.subr.bf16.mxu0 0
        %984 = vmatpush1.bf16.xpose.msra.mxu0 0
        %985 = vmatprep.subr.bf16.mxu0 0
        %986 = vmatpush1.bf16.xpose.msra.mxu0 0
        %987 = vmatprep.subr.bf16.mxu0 0
        %988 = vmatpush1.bf16.xpose.msra.mxu0 0
        %989 = vmatprep.subr.bf16.mxu0 0
        %990 = vmatpush1.bf16.xpose.msra.mxu0 0
        %991 = vmatprep.subr.bf16.mxu0 0
        %992 = vmatpush1.bf16.xpose.msra.mxu0 0
        %993 = vmatprep.subr.bf16.mxu0 0
        %994 = vmatpush1.bf16.xpose.msra.mxu0 0
        %995 = vmatprep.subr.bf16.mxu0 0
        %996 = vmatpush1.bf16.xpose.msra.mxu0 0
        %997 = vmatprep.subr.bf16.mxu0 0
        %998 = vmatpush1.bf16.xpose.msra.mxu0 0
        %999 = vmatprep.subr.bf16.mxu0 0
        %1000 = vmatpush1.bf16.xpose.msra.mxu0 0
        %1001 = vmatprep.subr.bf16.mxu0 0
        %1002 = vmatpush1.bf16.xpose.msra.mxu0 0
        %1003 = vmatprep.subr.bf16.mxu0 0
        %1004 = vmatpush1.bf16.xpose.msra.mxu0 0
        %1005 = vmatprep.subr.bf16.mxu0 0
        %1006 = vmatpush1.bf16.xpose.msra.mxu0 0
        %1007 = vmatprep.subr.bf16.mxu0 0
        %1008 = vmatpush1.bf16.xpose.msra.mxu0 0
        %1009 = vmatprep.subr.bf16.mxu0 0
        %1010 = vmatpush1.bf16.xpose.msra.mxu0 0
        %1011 = vmatprep.subr.bf16.mxu0 0
        %1012 = vmatpush1.bf16.xpose.msra.mxu0 0
        %1013 = vmatprep.mubr.bf16.mxu0 0
        %1014 = vmatmul.mubr.bf16.gmra.mrb[0].mxu0 %v976
        %v1015 = vpop.f32.mrb[0].mxu0
        %v1016 = vadd.f32 0.0, %v1015
        %v1017 = vpop.f32.mrb[0].mxu0
        %v1018 = vpop.f32.mrb[0].mxu0
        %v1019 = vpop.f32.mrb[0].mxu0
        %1020 = vdwg.mxu0
        %v1022 = vsel %vm974, %v963, 0
        %v1025 = vsel %vm974, %v967, 0
        %1027 = vmatprep.subr.bf16.mxu0 0
        %1028 = vmatpush1.bf16.xpose.msra.mxu0 %v1025
        %1029 = vmatprep.subr.bf16.mxu0 0
        %1030 = vmatpush1.bf16.xpose.msra.mxu0 0
        %1031 = vmatprep.subr.bf16.mxu0 0
        %1032 = vmatpush1.bf16.xpose.msra.mxu0 0
        %1033 = vmatprep.subr.bf16.mxu0 0
        %1034 = vmatpush1.bf16.xpose.msra.mxu0 0
        %1035 = vmatprep.subr.bf16.mxu0 0
        %1036 = vmatpush1.bf16.xpose.msra.mxu0 0
        %1037 = vmatprep.subr.bf16.mxu0 0
        %1038 = vmatpush1.bf16.xpose.msra.mxu0 0
        %1039 = vmatprep.subr.bf16.mxu0 0
        %1040 = vmatpush1.bf16.xpose.msra.mxu0 0
        %1041 = vmatprep.subr.bf16.mxu0 0
        %1042 = vmatpush1.bf16.xpose.msra.mxu0 0
        %1043 = vmatprep.subr.bf16.mxu0 0
        %1044 = vmatpush1.bf16.xpose.msra.mxu0 0
        %1045 = vmatprep.subr.bf16.mxu0 0
        %1046 = vmatpush1.bf16.xpose.msra.mxu0 0
        %1047 = vmatprep.subr.bf16.mxu0 0
        %1048 = vmatpush1.bf16.xpose.msra.mxu0 0
        %1049 = vmatprep.subr.bf16.mxu0 0
        %1050 = vmatpush1.bf16.xpose.msra.mxu0 0
        %1051 = vmatprep.subr.bf16.mxu0 0
        %1052 = vmatpush1.bf16.xpose.msra.mxu0 0
        %1053 = vmatprep.subr.bf16.mxu0 0
        %1054 = vmatpush1.bf16.xpose.msra.mxu0 0
        %1055 = vmatprep.subr.bf16.mxu0 0
        %1056 = vmatpush1.bf16.xpose.msra.mxu0 0
        %1057 = vmatprep.subr.bf16.mxu0 0
        %1058 = vmatpush1.bf16.xpose.msra.mxu0 0
        %1059 = vmatprep.mubr.bf16.mxu0 0
        %1060 = vmatmul.mubr.bf16.gmra.mrb[0].mxu0 %v1022
        %v1061 = vpop.f32.mrb[0].mxu0
        %v1062 = vadd.f32 0.0, %v1061
        %v1063 = vpop.f32.mrb[0].mxu0
        %v1064 = vpop.f32.mrb[0].mxu0
        %v1065 = vpop.f32.mrb[0].mxu0
        %1066 = vdwg.mxu0
        %v1068 = vsel %vm974, %v964, 0
        %v1071 = vsel %vm974, %v968, 0
        %1073 = vmatprep.subr.bf16.mxu0 0
        %1074 = vmatpush1.bf16.xpose.msra.mxu0 %v1071
        %1075 = vmatprep.subr.bf16.mxu0 0
        %1076 = vmatpush1.bf16.xpose.msra.mxu0 0
        %1077 = vmatprep.subr.bf16.mxu0 0
        %1078 = vmatpush1.bf16.xpose.msra.mxu0 0
        %1079 = vmatprep.subr.bf16.mxu0 0
        %1080 = vmatpush1.bf16.xpose.msra.mxu0 0
        %1081 = vmatprep.subr.bf16.mxu0 0
        %1082 = vmatpush1.bf16.xpose.msra.mxu0 0
        %1083 = vmatprep.subr.bf16.mxu0 0
        %1084 = vmatpush1.bf16.xpose.msra.mxu0 0
        %1085 = vmatprep.subr.bf16.mxu0 0
        %1086 = vmatpush1.bf16.xpose.msra.mxu0 0
        %1087 = vmatprep.subr.bf16.mxu0 0
        %1088 = vmatpush1.bf16.xpose.msra.mxu0 0
        %1089 = vmatprep.subr.bf16.mxu0 0
        %1090 = vmatpush1.bf16.xpose.msra.mxu0 0
        %1091 = vmatprep.subr.bf16.mxu0 0
        %1092 = vmatpush1.bf16.xpose.msra.mxu0 0
        %1093 = vmatprep.subr.bf16.mxu0 0
        %1094 = vmatpush1.bf16.xpose.msra.mxu0 0
        %1095 = vmatprep.subr.bf16.mxu0 0
        %1096 = vmatpush1.bf16.xpose.msra.mxu0 0
        %1097 = vmatprep.subr.bf16.mxu0 0
        %1098 = vmatpush1.bf16.xpose.msra.mxu0 0
        %1099 = vmatprep.subr.bf16.mxu0 0
        %1100 = vmatpush1.bf16.xpose.msra.mxu0 0
        %1101 = vmatprep.subr.bf16.mxu0 0
        %1102 = vmatpush1.bf16.xpose.msra.mxu0 0
        %1103 = vmatprep.subr.bf16.mxu0 0
        %1104 = vmatpush1.bf16.xpose.msra.mxu0 0
        %1105 = vmatprep.mubr.bf16.mxu0 0
        %1106 = vmatmul.mubr.bf16.gmra.mrb[0].mxu0 %v1068
        %v1107 = vpop.f32.mrb[0].mxu0
        %v1108 = vadd.f32 0.0, %v1107
        %v1109 = vpop.f32.mrb[0].mxu0
        %v1110 = vpop.f32.mrb[0].mxu0
        %v1111 = vpop.f32.mrb[0].mxu0
        %1112 = vdwg.mxu0
        %v1114 = vsel %vm974, %v965, 0
        %v1117 = vsel %vm974, %v969, 0
        %1119 = vmatprep.subr.bf16.mxu0 0
        %1120 = vmatpush1.bf16.xpose.msra.mxu0 %v1117
        %1121 = vmatprep.subr.bf16.mxu0 0
        %1122 = vmatpush1.bf16.xpose.msra.mxu0 0
        %1123 = vmatprep.subr.bf16.mxu0 0
        %1124 = vmatpush1.bf16.xpose.msra.mxu0 0
        %1125 = vmatprep.subr.bf16.mxu0 0
        %1126 = vmatpush1.bf16.xpose.msra.mxu0 0
        %1127 = vmatprep.subr.bf16.mxu0 0
        %1128 = vmatpush1.bf16.xpose.msra.mxu0 0
        %1129 = vmatprep.subr.bf16.mxu0 0
        %1130 = vmatpush1.bf16.xpose.msra.mxu0 0
        %1131 = vmatprep.subr.bf16.mxu0 0
        %1132 = vmatpush1.bf16.xpose.msra.mxu0 0
        %1133 = vmatprep.subr.bf16.mxu0 0
        %1134 = vmatpush1.bf16.xpose.msra.mxu0 0
        %1135 = vmatprep.subr.bf16.mxu0 0
        %1136 = vmatpush1.bf16.xpose.msra.mxu0 0
        %1137 = vmatprep.subr.bf16.mxu0 0
        %1138 = vmatpush1.bf16.xpose.msra.mxu0 0
        %1139 = vmatprep.subr.bf16.mxu0 0
        %1140 = vmatpush1.bf16.xpose.msra.mxu0 0
        %1141 = vmatprep.subr.bf16.mxu0 0
        %1142 = vmatpush1.bf16.xpose.msra.mxu0 0
        %1143 = vmatprep.subr.bf16.mxu0 0
        %1144 = vmatpush1.bf16.xpose.msra.mxu0 0
        %1145 = vmatprep.subr.bf16.mxu0 0
        %1146 = vmatpush1.bf16.xpose.msra.mxu0 0
        %1147 = vmatprep.subr.bf16.mxu0 0
        %1148 = vmatpush1.bf16.xpose.msra.mxu0 0
        %1149 = vmatprep.subr.bf16.mxu0 0
        %1150 = vmatpush1.bf16.xpose.msra.mxu0 0
        %1151 = vmatprep.mubr.bf16.mxu0 0
        %1152 = vmatmul.mubr.bf16.gmra.mrb[0].mxu0 %v1114
        %v1153 = vpop.f32.mrb[0].mxu0
        %v1154 = vadd.f32 0.0, %v1153
        %v1155 = vpop.f32.mrb[0].mxu0
        %v1156 = vpop.f32.mrb[0].mxu0
        %v1157 = vpop.f32.mrb[0].mxu0
        %1158 = vdwg.mxu0
        %v1159 = vsel %vm974, %v1016, -inf
        %1160 = vmax.xlane.f32.xlu0 %v1159
        %v1161 = vpop.xlane.xlu0 %1160
        %v1162 = vsel %vm974, %v1062, -inf
        %1163 = vmax.xlane.f32.xlu0 %v1162
        %v1164 = vpop.xlane.xlu0 %1163
        %v1165 = vsel %vm974, %v1108, -inf
        %1166 = vmax.xlane.f32.xlu0 %v1165
        %v1167 = vpop.xlane.xlu0 %1166
        %v1168 = vsel %vm974, %v1154, -inf
        %1169 = vmax.xlane.f32.xlu0 %v1168
        %v1170 = vpop.xlane.xlu0 %1169
        %v1171 = vsub.f32 -inf, %v1161
        %v1172 = vsub.f32 -inf, %v1164
        %v1173 = vsub.f32 -inf, %v1167
        %v1174 = vsub.f32 -inf, %v1170
        %v1175 = vmul.f32 %v1171, 1.442695
        %v1176 = vpow.pop %v1175
        %v1177 = vmul.f32 %v1172, 1.442695
        %v1178 = vpow.pop %v1177
        %v1179 = vmul.f32 %v1173, 1.442695
        %v1180 = vpow.pop %v1179
        %v1181 = vmul.f32 %v1174, 1.442695
        %v1182 = vpow.pop %v1181
        %v1183 = vsub.f32 %v1016, %v1161
        %v1184 = vsub.f32 %v1062, %v1164
        %v1185 = vsub.f32 %v1108, %v1167
        %v1186 = vsub.f32 %v1154, %v1170
        %v1187 = vmul.f32 %v1183, 1.442695
        %v1188 = vpow.pop %v1187
        %v1189 = vmul.f32 %v1184, 1.442695
        %v1190 = vpow.pop %v1189
        %v1191 = vmul.f32 %v1185, 1.442695
        %v1192 = vpow.pop %v1191
        %v1193 = vmul.f32 %v1186, 1.442695
        %v1194 = vpow.pop %v1193
        %v1195 = vmul.f32 %v1176, 0.0
        %v1196 = vmul.f32 %v1178, 0.0
        %v1197 = vmul.f32 %v1180, 0.0
        %v1198 = vmul.f32 %v1182, 0.0
        %v1199 = vsel %vm974, %v1188, 0.0
        %1200 = vadd.xlane.f32.xlu0 %v1199
        %v1201 = vpop.xlane.xlu0 %1200
        %v1202 = vsel %vm974, %v1190, 0.0
        %1203 = vadd.xlane.f32.xlu0 %v1202
        %v1204 = vpop.xlane.xlu0 %1203
        %v1205 = vsel %vm974, %v1192, 0.0
        %1206 = vadd.xlane.f32.xlu0 %v1205
        %v1207 = vpop.xlane.xlu0 %1206
        %v1208 = vsel %vm974, %v1194, 0.0
        %1209 = vadd.xlane.f32.xlu0 %v1208
        %v1210 = vpop.xlane.xlu0 %1209
        %v1211 = vadd.f32 %v1195, %v1201
        %v1212 = vadd.f32 %v1196, %v1204
        %v1213 = vadd.f32 %v1197, %v1207
        %v1214 = vadd.f32 %v1198, %v1210
        %v1215 = vpack.c.bf16 %v1188, %v1188
        %v1216 = vpack.c.bf16 %v1190, %v1190
        %v1217 = vpack.c.bf16 %v1192, %v1192
        %v1218 = vpack.c.bf16 %v1194, %v1194
        %v1220 = vsel %vm974, %v1215, 0
        %vm1222 = vcmask 1043456
        %v1224 = vsel %vm1222, %v970, 0
        %1226 = vmatprep.subr.bf16.mxu0 0
        %1227 = vmatpush1.bf16.msra.mxu0 %v1224
        %1228 = vmatprep.subr.bf16.mxu0 0
        %1229 = vmatpush1.bf16.msra.mxu0 0
        %1230 = vmatprep.subr.bf16.mxu0 0
        %1231 = vmatpush1.bf16.msra.mxu0 0
        %1232 = vmatprep.subr.bf16.mxu0 0
        %1233 = vmatpush1.bf16.msra.mxu0 0
        %1234 = vmatprep.subr.bf16.mxu0 0
        %1235 = vmatpush1.bf16.msra.mxu0 0
        %1236 = vmatprep.subr.bf16.mxu0 0
        %1237 = vmatpush1.bf16.msra.mxu0 0
        %1238 = vmatprep.subr.bf16.mxu0 0
        %1239 = vmatpush1.bf16.msra.mxu0 0
        %1240 = vmatprep.subr.bf16.mxu0 0
        %1241 = vmatpush1.bf16.msra.mxu0 0
        %1242 = vmatprep.subr.bf16.mxu0 0
        %1243 = vmatpush1.bf16.msra.mxu0 0
        %1244 = vmatprep.subr.bf16.mxu0 0
        %1245 = vmatpush1.bf16.msra.mxu0 0
        %1246 = vmatprep.subr.bf16.mxu0 0
        %1247 = vmatpush1.bf16.msra.mxu0 0
        %1248 = vmatprep.subr.bf16.mxu0 0
        %1249 = vmatpush1.bf16.msra.mxu0 0
        %1250 = vmatprep.subr.bf16.mxu0 0
        %1251 = vmatpush1.bf16.msra.mxu0 0
        %1252 = vmatprep.subr.bf16.mxu0 0
        %1253 = vmatpush1.bf16.msra.mxu0 0
        %1254 = vmatprep.subr.bf16.mxu0 0
        %1255 = vmatpush1.bf16.msra.mxu0 0
        %1256 = vmatprep.subr.bf16.mxu0 0
        %1257 = vmatpush1.bf16.msra.mxu0 0
        %1258 = vmatprep.mubr.bf16.mxu0 0
        %1259 = vmatmul.mubr.bf16.gmra.mrb[0].mxu0 %v1220
        %v1260 = vpop.f32.mrb[0].mxu0
        %v1261 = vadd.f32 0.0, %v1260
        %v1262 = vpop.f32.mrb[0].mxu0
        %v1263 = vpop.f32.mrb[0].mxu0
        %v1264 = vpop.f32.mrb[0].mxu0
        %1265 = vdwg.mxu0
        %v1267 = vsel %vm974, %v1216, 0
        %v1270 = vsel %vm1222, %v971, 0
        %1272 = vmatprep.subr.bf16.mxu0 0
        %1273 = vmatpush1.bf16.msra.mxu0 %v1270
        %1274 = vmatprep.subr.bf16.mxu0 0
        %1275 = vmatpush1.bf16.msra.mxu0 0
        %1276 = vmatprep.subr.bf16.mxu0 0
        %1277 = vmatpush1.bf16.msra.mxu0 0
        %1278 = vmatprep.subr.bf16.mxu0 0
        %1279 = vmatpush1.bf16.msra.mxu0 0
        %1280 = vmatprep.subr.bf16.mxu0 0
        %1281 = vmatpush1.bf16.msra.mxu0 0
        %1282 = vmatprep.subr.bf16.mxu0 0
        %1283 = vmatpush1.bf16.msra.mxu0 0
        %1284 = vmatprep.subr.bf16.mxu0 0
        %1285 = vmatpush1.bf16.msra.mxu0 0
        %1286 = vmatprep.subr.bf16.mxu0 0
        %1287 = vmatpush1.bf16.msra.mxu0 0
        %1288 = vmatprep.subr.bf16.mxu0 0
        %1289 = vmatpush1.bf16.msra.mxu0 0
        %1290 = vmatprep.subr.bf16.mxu0 0
        %1291 = vmatpush1.bf16.msra.mxu0 0
        %1292 = vmatprep.subr.bf16.mxu0 0
        %1293 = vmatpush1.bf16.msra.mxu0 0
        %1294 = vmatprep.subr.bf16.mxu0 0
        %1295 = vmatpush1.bf16.msra.mxu0 0
        %1296 = vmatprep.subr.bf16.mxu0 0
        %1297 = vmatpush1.bf16.msra.mxu0 0
        %1298 = vmatprep.subr.bf16.mxu0 0
        %1299 = vmatpush1.bf16.msra.mxu0 0
        %1300 = vmatprep.subr.bf16.mxu0 0
        %1301 = vmatpush1.bf16.msra.mxu0 0
        %1302 = vmatprep.subr.bf16.mxu0 0
        %1303 = vmatpush1.bf16.msra.mxu0 0
        %1304 = vmatprep.mubr.bf16.mxu0 0
        %1305 = vmatmul.mubr.bf16.gmra.mrb[0].mxu0 %v1267
        %v1306 = vpop.f32.mrb[0].mxu0
        %v1307 = vadd.f32 0.0, %v1306
        %v1308 = vpop.f32.mrb[0].mxu0
        %v1309 = vpop.f32.mrb[0].mxu0
        %v1310 = vpop.f32.mrb[0].mxu0
        %1311 = vdwg.mxu0
        %v1313 = vsel %vm974, %v1217, 0
        %v1316 = vsel %vm1222, %v972, 0
        %1318 = vmatprep.subr.bf16.mxu0 0
        %1319 = vmatpush1.bf16.msra.mxu0 %v1316
        %1320 = vmatprep.subr.bf16.mxu0 0
        %1321 = vmatpush1.bf16.msra.mxu0 0
        %1322 = vmatprep.subr.bf16.mxu0 0
        %1323 = vmatpush1.bf16.msra.mxu0 0
        %1324 = vmatprep.subr.bf16.mxu0 0
        %1325 = vmatpush1.bf16.msra.mxu0 0
        %1326 = vmatprep.subr.bf16.mxu0 0
        %1327 = vmatpush1.bf16.msra.mxu0 0
        %1328 = vmatprep.subr.bf16.mxu0 0
        %1329 = vmatpush1.bf16.msra.mxu0 0
        %1330 = vmatprep.subr.bf16.mxu0 0
        %1331 = vmatpush1.bf16.msra.mxu0 0
        %1332 = vmatprep.subr.bf16.mxu0 0
        %1333 = vmatpush1.bf16.msra.mxu0 0
        %1334 = vmatprep.subr.bf16.mxu0 0
        %1335 = vmatpush1.bf16.msra.mxu0 0
        %1336 = vmatprep.subr.bf16.mxu0 0
        %1337 = vmatpush1.bf16.msra.mxu0 0
        %1338 = vmatprep.subr.bf16.mxu0 0
        %1339 = vmatpush1.bf16.msra.mxu0 0
        %1340 = vmatprep.subr.bf16.mxu0 0
        %1341 = vmatpush1.bf16.msra.mxu0 0
        %1342 = vmatprep.subr.bf16.mxu0 0
        %1343 = vmatpush1.bf16.msra.mxu0 0
        %1344 = vmatprep.subr.bf16.mxu0 0
        %1345 = vmatpush1.bf16.msra.mxu0 0
        %1346 = vmatprep.subr.bf16.mxu0 0
        %1347 = vmatpush1.bf16.msra.mxu0 0
        %1348 = vmatprep.subr.bf16.mxu0 0
        %1349 = vmatpush1.bf16.msra.mxu0 0
        %1350 = vmatprep.mubr.bf16.mxu0 0
        %1351 = vmatmul.mubr.bf16.gmra.mrb[0].mxu0 %v1313
        %v1352 = vpop.f32.mrb[0].mxu0
        %v1353 = vadd.f32 0.0, %v1352
        %v1354 = vpop.f32.mrb[0].mxu0
        %v1355 = vpop.f32.mrb[0].mxu0
        %v1356 = vpop.f32.mrb[0].mxu0
        %1357 = vdwg.mxu0
        %v1359 = vsel %vm974, %v1218, 0
        %v1362 = vsel %vm1222, %v973, 0
        %1364 = vmatprep.subr.bf16.mxu0 0
        %1365 = vmatpush1.bf16.msra.mxu0 %v1362
        %1366 = vmatprep.subr.bf16.mxu0 0
        %1367 = vmatpush1.bf16.msra.mxu0 0
        %1368 = vmatprep.subr.bf16.mxu0 0
        %1369 = vmatpush1.bf16.msra.mxu0 0
        %1370 = vmatprep.subr.bf16.mxu0 0
        %1371 = vmatpush1.bf16.msra.mxu0 0
        %1372 = vmatprep.subr.bf16.mxu0 0
        %1373 = vmatpush1.bf16.msra.mxu0 0
        %1374 = vmatprep.subr.bf16.mxu0 0
        %1375 = vmatpush1.bf16.msra.mxu0 0
        %1376 = vmatprep.subr.bf16.mxu0 0
        %1377 = vmatpush1.bf16.msra.mxu0 0
        %1378 = vmatprep.subr.bf16.mxu0 0
        %1379 = vmatpush1.bf16.msra.mxu0 0
        %1380 = vmatprep.subr.bf16.mxu0 0
        %1381 = vmatpush1.bf16.msra.mxu0 0
        %1382 = vmatprep.subr.bf16.mxu0 0
        %1383 = vmatpush1.bf16.msra.mxu0 0
        %1384 = vmatprep.subr.bf16.mxu0 0
        %1385 = vmatpush1.bf16.msra.mxu0 0
        %1386 = vmatprep.subr.bf16.mxu0 0
        %1387 = vmatpush1.bf16.msra.mxu0 0
        %1388 = vmatprep.subr.bf16.mxu0 0
        %1389 = vmatpush1.bf16.msra.mxu0 0
        %1390 = vmatprep.subr.bf16.mxu0 0
        %1391 = vmatpush1.bf16.msra.mxu0 0
        %1392 = vmatprep.subr.bf16.mxu0 0
        %1393 = vmatpush1.bf16.msra.mxu0 0
        %1394 = vmatprep.subr.bf16.mxu0 0
        %1395 = vmatpush1.bf16.msra.mxu0 0
        %1396 = vmatprep.mubr.bf16.mxu0 0
        %1397 = vmatmul.mubr.bf16.gmra.mrb[0].mxu0 %v1359
        %v1398 = vpop.f32.mrb[0].mxu0
        %v1399 = vadd.f32 0.0, %v1398
        %v1400 = vpop.f32.mrb[0].mxu0
        %v1401 = vpop.f32.mrb[0].mxu0
        %v1402 = vpop.f32.mrb[0].mxu0
        %1403 = vdwg.mxu0
        %v1404 = vadd.f32 %v1195, %v1261
        %v1405 = vadd.f32 %v1196, %v1307
        %v1406 = vadd.f32 %v1197, %v1353
        %v1407 = vadd.f32 %v1198, %v1399
        %v1408 = vrcp.pop %v1211
        %v1409 = vrcp.pop %v1212
        %v1410 = vrcp.pop %v1213
        %v1411 = vrcp.pop %v1214
        %v1412 = vmul.f32 %v1404, %v1408
        %v1413 = vmul.f32 %v1405, %v1409
        %v1414 = vmul.f32 %v1406, %v1410
        %v1415 = vmul.f32 %v1407, %v1411
        %1416 = vst.msk [vmem:[#allocation5] sm:$0xff] %vm974, %v1412
        %1418 = vrot.lane.b32.xlu0 %v1413, 8
        %v1419 = vpop.permute.xlu0 %1418
        %vm1421 = vcmask 130112
        %1422 = vst.msk [vmem:[#allocation5] sm:$0xff] %vm1421, %v1419
        %1424 = vrot.lane.b32.xlu0 %v1414, 16
        %v1425 = vpop.permute.xlu0 %1424
        %vm1427 = vcmask 195712
        %1428 = vst.msk [vmem:[#allocation5] sm:$0xff] %vm1427, %v1425
        %1430 = vrot.lane.b32.xlu0 %v1415, 24
        %v1431 = vpop.permute.xlu0 %1430
        %vm1433 = vcmask 261312
        %1434 = vst.msk [vmem:[#allocation5] sm:$0xff] %vm1433, %v1431
        %v1435 = vld [vmem:[#allocation5] sm:$0xff]
        %v1436 = vpack.c.bf16 %v1435, %v1435
        %v1437 = vld [vmem:[#allocation12] sm:$0xf]
        %v1438 = vld [vmem:[#allocation12 + $0x4] sm:$0xf]
        %v1439 = vld [vmem:[#allocation12 + $0x8] sm:$0xf]
        %v1440 = vld [vmem:[#allocation12 + $0xc] sm:$0xf]
        %v1441 = vld [vmem:[#allocation14] sm:$0x1]
        %v1443 = vlaneseq
        %v1444 = vshrl.u32 %v1443, 7
        %v1445 = vsub.s32 0, %v1444
        %v1446 = vrot.slane %v1441, %v1445
        %v1452 = vunpack.c.l.b16 %v1437
        %v1453 = vunpack.c.l.b16 %v1438
        %v1454 = vunpack.c.l.b16 %v1439
        %v1455 = vunpack.c.l.b16 %v1440
        %v1456 = vpack.c.b16 %v1453, %v1452
        %v1457 = vpack.c.b16 %v1455, %v1454
        %v1461 = vsel %vm897, %v1436, 0
        %1463 = vmatprep.subr.bf16.mxu0 0
        %1464 = vmatpush1.bf16.msra.mxu0 %v1456
        %1465 = vmatprep.subr.bf16.mxu0 0
        %1466 = vmatpush1.bf16.msra.mxu0 %v1457
        %1467 = vmatprep.subr.bf16.mxu0 0
        %1468 = vmatpush1.bf16.msra.mxu0 0
        %1469 = vmatprep.subr.bf16.mxu0 0
        %1470 = vmatpush1.bf16.msra.mxu0 0
        %1471 = vmatprep.subr.bf16.mxu0 0
        %1472 = vmatpush1.bf16.msra.mxu0 0
        %1473 = vmatprep.subr.bf16.mxu0 0
        %1474 = vmatpush1.bf16.msra.mxu0 0
        %1475 = vmatprep.subr.bf16.mxu0 0
        %1476 = vmatpush1.bf16.msra.mxu0 0
        %1477 = vmatprep.subr.bf16.mxu0 0
        %1478 = vmatpush1.bf16.msra.mxu0 0
        %1479 = vmatprep.subr.bf16.mxu0 0
        %1480 = vmatpush1.bf16.msra.mxu0 0
        %1481 = vmatprep.subr.bf16.mxu0 0
        %1482 = vmatpush1.bf16.msra.mxu0 0
        %1483 = vmatprep.subr.bf16.mxu0 0
        %1484 = vmatpush1.bf16.msra.mxu0 0
        %1485 = vmatprep.subr.bf16.mxu0 0
        %1486 = vmatpush1.bf16.msra.mxu0 0
        %1487 = vmatprep.subr.bf16.mxu0 0
        %1488 = vmatpush1.bf16.msra.mxu0 0
        %1489 = vmatprep.subr.bf16.mxu0 0
        %1490 = vmatpush1.bf16.msra.mxu0 0
        %1491 = vmatprep.subr.bf16.mxu0 0
        %1492 = vmatpush1.bf16.msra.mxu0 0
        %1493 = vmatprep.subr.bf16.mxu0 0
        %1494 = vmatpush1.bf16.msra.mxu0 0
        %1495 = vmatprep.mubr.bf16.mxu0 0
        %1496 = vmatmul.mubr.bf16.gmra.mrb[0].mxu0 %v1461
        %v1497 = vpop.f32.mrb[0].mxu0
        %v1498 = vadd.f32 %v1446, %v1497
        %v1499 = vpop.f32.mrb[0].mxu0
        %v1500 = vpop.f32.mrb[0].mxu0
        %v1501 = vpop.f32.mrb[0].mxu0
        %1502 = vdwg.mxu0
        %v1503 = vadd.f32 %v872, %v1498
        %v1504 = vsel %vm897, %v1503, 0.0
        %1505 = vadd.xlane.f32.xlu0 %v1504
        %v1506 = vpop.xlane.xlu0 %1505
        %v1507 = vrcp.pop 32.0
        %v1508 = vmul.f32 %v1506, %v1507
        %v1509 = vsub.f32 %v1503, %v1508
        %v1510 = vmul.f32 %v1509, %v1509
        %v1511 = vsel %vm897, %v1510, 0.0
        %1512 = vadd.xlane.f32.xlu0 %v1511
        %v1513 = vpop.xlane.xlu0 %1512
        %v1514 = vmul.f32 %v1513, %v1507
        %v1515 = vadd.f32 %v1514, 1e-05
        %v1516 = vrsqrt.pop %v1515
        %v1517 = vmul.f32 %v1509, %v1516
        %v1518 = vld [vmem:[%s14] sm:$0x1]
        %v1520 = vlaneseq
        %v1521 = vshrl.u32 %v1520, 7
        %v1522 = vsub.s32 0, %v1521
        %v1523 = vrot.slane %v1518, %v1522
        %v1525 = vmul.f32 %v1517, %v1523
        %v1526 = vld [vmem:[%s15] sm:$0x1]
        %v1528 = vlaneseq
        %v1529 = vshrl.u32 %v1528, 7
        %v1530 = vsub.s32 0, %v1529
        %v1531 = vrot.slane %v1526, %v1530
        %v1533 = vadd.f32 %v1525, %v1531
        %v1534 = vpack.c.bf16 %v1533, %v1533
        %v1535 = vld [vmem:[%s10] sm:$0xf]
        %v1536 = vld [vmem:[%s10 + $0x4] sm:$0xf]
        %v1537 = vld [vmem:[%s10 + $0x8] sm:$0xf]
        %v1538 = vld [vmem:[%s10 + $0xc] sm:$0xf]
        %v1539 = vld [vmem:[%s11] sm:$0x1]
        %v1541 = vlaneseq
        %v1542 = vshrl.u32 %v1541, 7
        %v1543 = vsub.s32 0, %v1542
        %v1544 = vrot.slane %v1539, %v1543
        %v1550 = vunpack.c.l.b16 %v1535
        %v1551 = vunpack.c.l.b16 %v1536
        %v1552 = vunpack.c.l.b16 %v1537
        %v1553 = vunpack.c.l.b16 %v1538
        %v1554 = vpack.c.b16 %v1551, %v1550
        %v1555 = vpack.c.b16 %v1553, %v1552
        %v1559 = vsel %vm897, %v1534, 0
        %1561 = vmatprep.subr.bf16.mxu0 0
        %1562 = vmatpush1.bf16.msra.mxu0 %v1554
        %1563 = vmatprep.subr.bf16.mxu0 0
        %1564 = vmatpush1.bf16.msra.mxu0 %v1555
        %1565 = vmatprep.subr.bf16.mxu0 0
        %1566 = vmatpush1.bf16.msra.mxu0 0
        %1567 = vmatprep.subr.bf16.mxu0 0
        %1568 = vmatpush1.bf16.msra.mxu0 0
        %1569 = vmatprep.subr.bf16.mxu0 0
        %1570 = vmatpush1.bf16.msra.mxu0 0
        %1571 = vmatprep.subr.bf16.mxu0 0
        %1572 = vmatpush1.bf16.msra.mxu0 0
        %1573 = vmatprep.subr.bf16.mxu0 0
        %1574 = vmatpush1.bf16.msra.mxu0 0
        %1575 = vmatprep.subr.bf16.mxu0 0
        %1576 = vmatpush1.bf16.msra.mxu0 0
        %1577 = vmatprep.subr.bf16.mxu0 0
        %1578 = vmatpush1.bf16.msra.mxu0 0
        %1579 = vmatprep.subr.bf16.mxu0 0
        %1580 = vmatpush1.bf16.msra.mxu0 0
        %1581 = vmatprep.subr.bf16.mxu0 0
        %1582 = vmatpush1.bf16.msra.mxu0 0
        %1583 = vmatprep.subr.bf16.mxu0 0
        %1584 = vmatpush1.bf16.msra.mxu0 0
        %1585 = vmatprep.subr.bf16.mxu0 0
        %1586 = vmatpush1.bf16.msra.mxu0 0
        %1587 = vmatprep.subr.bf16.mxu0 0
        %1588 = vmatpush1.bf16.msra.mxu0 0
        %1589 = vmatprep.subr.bf16.mxu0 0
        %1590 = vmatpush1.bf16.msra.mxu0 0
        %1591 = vmatprep.subr.bf16.mxu0 0
        %1592 = vmatpush1.bf16.msra.mxu0 0
        %1593 = vmatprep.mubr.bf16.mxu0 0
        %1594 = vmatmul.mubr.bf16.gmra.mrb[0].mxu0 %v1559
        %v1595 = vpop.f32.mrb[0].mxu0
        %v1596 = vadd.f32 %v1544, %v1595
        %v1597 = vpop.f32.mrb[0].mxu0
        %v1598 = vpop.f32.mrb[0].mxu0
        %v1599 = vpop.f32.mrb[0].mxu0
        %1600 = vdwg.mxu0
        %vm1601 = vcmask 523264
        %1602 = vst.msk [vmem:[%s687] sm:$0xff] %vm1601, %v1596
        %v1603 = vmax.f32 %v1596, 0.0
        %v1604 = vpack.c.bf16 %v1603, %v1603
        %v1605 = vld [vmem:[%s12] sm:$0xf]
        %v1606 = vld [vmem:[%s12 + $0x4] sm:$0xf]
        %v1607 = vld [vmem:[%s12 + $0x8] sm:$0xf]
        %v1608 = vld [vmem:[%s12 + $0xc] sm:$0xf]
        %v1609 = vld [vmem:[%s12 + $0x10] sm:$0xf]
        %v1610 = vld [vmem:[%s12 + $0x14] sm:$0xf]
        %v1611 = vld [vmem:[%s12 + $0x18] sm:$0xf]
        %v1612 = vld [vmem:[%s12 + $0x1c] sm:$0xf]
        %v1613 = vld [vmem:[%s13] sm:$0x1]
        %v1615 = vlaneseq
        %v1616 = vshrl.u32 %v1615, 7
        %v1617 = vsub.s32 0, %v1616
        %v1618 = vrot.slane %v1613, %v1617
        %v1628 = vunpack.c.l.b16 %v1605
        %v1629 = vunpack.c.l.b16 %v1606
        %v1630 = vunpack.c.l.b16 %v1607
        %v1631 = vunpack.c.l.b16 %v1608
        %v1632 = vunpack.c.l.b16 %v1609
        %v1633 = vunpack.c.l.b16 %v1610
        %v1634 = vunpack.c.l.b16 %v1611
        %v1635 = vunpack.c.l.b16 %v1612
        %v1636 = vpack.c.b16 %v1629, %v1628
        %v1637 = vpack.c.b16 %v1631, %v1630
        %v1638 = vpack.c.b16 %v1633, %v1632
        %v1639 = vpack.c.b16 %v1635, %v1634
        %v1645 = vsel %vm1601, %v1604, 0
        %1647 = vmatprep.subr.bf16.mxu0 0
        %1648 = vmatpush1.bf16.msra.mxu0 %v1636
        %1649 = vmatprep.subr.bf16.mxu0 0
        %1650 = vmatpush1.bf16.msra.mxu0 %v1637
        %1651 = vmatprep.subr.bf16.mxu0 0
        %1652 = vmatpush1.bf16.msra.mxu0 %v1638
        %1653 = vmatprep.subr.bf16.mxu0 0
        %1654 = vmatpush1.bf16.msra.mxu0 %v1639
        %1655 = vmatprep.subr.bf16.mxu0 0
        %1656 = vmatpush1.bf16.msra.mxu0 0
        %1657 = vmatprep.subr.bf16.mxu0 0
        %1658 = vmatpush1.bf16.msra.mxu0 0
        %1659 = vmatprep.subr.bf16.mxu0 0
        %1660 = vmatpush1.bf16.msra.mxu0 0
        %1661 = vmatprep.subr.bf16.mxu0 0
        %1662 = vmatpush1.bf16.msra.mxu0 0
        %1663 = vmatprep.subr.bf16.mxu0 0
        %1664 = vmatpush1.bf16.msra.mxu0 0
        %1665 = vmatprep.subr.bf16.mxu0 0
        %1666 = vmatpush1.bf16.msra.mxu0 0
        %1667 = vmatprep.subr.bf16.mxu0 0
        %1668 = vmatpush1.bf16.msra.mxu0 0
        %1669 = vmatprep.subr.bf16.mxu0 0
        %1670 = vmatpush1.bf16.msra.mxu0 0
        %1671 = vmatprep.subr.bf16.mxu0 0
        %1672 = vmatpush1.bf16.msra.mxu0 0
        %1673 = vmatprep.subr.bf16.mxu0 0
        %1674 = vmatpush1.bf16.msra.mxu0 0
        %1675 = vmatprep.subr.bf16.mxu0 0
        %1676 = vmatpush1.bf16.msra.mxu0 0
        %1677 = vmatprep.subr.bf16.mxu0 0
        %1678 = vmatpush1.bf16.msra.mxu0 0
        %1679 = vmatprep.mubr.bf16.mxu0 0
        %1680 = vmatmul.mubr.bf16.gmra.mrb[0].mxu0 %v1645
        %v1681 = vpop.f32.mrb[0].mxu0
        %v1682 = vadd.f32 %v1618, %v1681
        %v1683 = vpop.f32.mrb[0].mxu0
        %v1684 = vpop.f32.mrb[0].mxu0
        %v1685 = vpop.f32.mrb[0].mxu0
        %1686 = vdwg.mxu0
        %v1687 = vadd.f32 %v1533, %v1682
        %v1688 = vsel %vm897, %v1687, 0.0
        %1689 = vadd.xlane.f32.xlu0 %v1688
        %v1690 = vpop.xlane.xlu0 %1689
        %v1691 = vmul.f32 %v1690, %v1507
        %v1692 = vsub.f32 %v1687, %v1691
        %v1693 = vmul.f32 %v1692, %v1692
        %v1694 = vsel %vm897, %v1693, 0.0
        %1695 = vadd.xlane.f32.xlu0 %v1694
        %v1696 = vpop.xlane.xlu0 %1695
        %v1697 = vmul.f32 %v1696, %v1507
        %v1698 = vadd.f32 %v1697, 1e-05
        %v1699 = vrsqrt.pop %v1698
        %v1700 = vmul.f32 %v1692, %v1699
        %v1701 = vld [vmem:[%s16] sm:$0x1]
        %v1703 = vlaneseq
        %v1704 = vshrl.u32 %v1703, 7
        %v1705 = vsub.s32 0, %v1704
        %v1706 = vrot.slane %v1701, %v1705
        %v1708 = vmul.f32 %v1700, %v1706
        %v1709 = vld [vmem:[%s17] sm:$0x1]
        %v1711 = vlaneseq
        %v1712 = vshrl.u32 %v1711, 7
        %v1713 = vsub.s32 0, %v1712
        %v1714 = vrot.slane %v1709, %v1713
        %v1716 = vadd.f32 %v1708, %v1714
        %1717 = vst.msk [vmem:[%s680] sm:$0xff] %vm897, %v1716
        %s1718 = sand.u32 %s445, 1
        %s1719 = scalar_lea.sflag [#allocation8], %s1718
        %s1720 = sand.u32 %s445, 1
        %s1721 = smul.addr %s1720, 8
        %s1722 = scalar_lea.vmem [#allocation15], %s1721
        %s1723 = sand.u32 %s473, 1
        %s1724 = scalar_lea.sflag [#allocation17], %s1723
        %s1725 = sand.u32 %s473, 1
        %s1726 = smul.addr %s1725, 8
        %s1727 = scalar_lea.vmem [#allocation16], %s1726
        // Predicated region
        $region117: #{tpu_custom_call.1} parent=91 // pred_check
          %p1728 = pneg %p455
        $region118: #{tpu_custom_call.1} parent=91 // pred_check_branch
          %1730 = sbr.rel (%p1728) target = $region120
        $region119: #{tpu_custom_call.1} parent=91 // pred_region
          %s1732 = ssub.s32 128, 128
          %1733 = vsyncadd %s1719, %s1732
          %s1734 = sadd.s32 %s45, %s44
          %s1735 = smul.addr %s1734, 128
          %s1736 = scalar_lea.hbm %s18, %s1735
          %s1738 = sshll.u32 %s1722, 4
          %s1739 = int_to_ptr.vmem [resolvable:$true] %s1738
          %1741 = dma.vmem_to_hbm [thread:$0]  %s1739, 128, %s1736, %s1719
        $region120: #{tpu_custom_call.1} parent=91 // pred_fallthru
          _
        // Predicated region
        $region121: #{tpu_custom_call.1} parent=91 // pred_check
          %p1742 = pneg %p483
        $region122: #{tpu_custom_call.1} parent=91 // pred_check_branch
          %1744 = sbr.rel (%p1742) target = $region124
        $region123: #{tpu_custom_call.1} parent=91 // pred_region
          %s1746 = ssub.s32 128, 128
          %1747 = vsyncadd %s1724, %s1746
          %s1748 = sadd.s32 %s45, %s44
          %s1749 = smul.addr %s1748, 128
          %s1750 = scalar_lea.hbm %s19, %s1749
          %s1752 = sshll.u32 %s1727, 4
          %s1753 = int_to_ptr.vmem [resolvable:$true] %s1752
          %1755 = dma.vmem_to_hbm [thread:$0]  %s1753, 128, %s1750, %s1724
        $region124: #{tpu_custom_call.1} parent=91 // pred_fallthru
          _
      $region92: #{tpu_custom_call.1} parent=5 // pred_fallthru
        _
      %p1756 = scmp.le.s32.totalorder 2, %s35
      // Predicated region
      $region125: #{tpu_custom_call.1} parent=5 // pred_check
        %p1757 = pneg %p1756
      $region126: #{tpu_custom_call.1} parent=5 // pred_check_branch
        %1759 = sbr.rel (%p1757) target = $region128
      $region127: #{tpu_custom_call.1} parent=5 // pred_region
        %s1760 = ssub.s32 %s35, 2
        // Predicated region
        $region129: #{tpu_custom_call.1} parent=127 // pred_check
          %p1761 = pneg %p461
        $region130: #{tpu_custom_call.1} parent=127 // pred_check_branch
          %1763 = sbr.rel (%p1761) target = $region132
        $region131: #{tpu_custom_call.1} parent=127 // pred_region
          %s1764 = sand.u32 %s446, 1
          %s1765 = scalar_lea.sflag [#allocation8], %s1764
          %s1766 = sand.u32 %s446, 1
          %s1767 = smul.addr %s1766, 8
          %s1768 = scalar_lea.vmem [#allocation15], %s1767
          %1769 = dma.done %s1765, 128
        $region132: #{tpu_custom_call.1} parent=127 // pred_fallthru
          _
        // Predicated region
        $region133: #{tpu_custom_call.1} parent=127 // pred_check
          %p1770 = pneg %p489
        $region134: #{tpu_custom_call.1} parent=127 // pred_check_branch
          %1772 = sbr.rel (%p1770) target = $region136
        $region135: #{tpu_custom_call.1} parent=127 // pred_region
          %s1773 = sand.u32 %s474, 1
          %s1774 = scalar_lea.sflag [#allocation17], %s1773
          %s1775 = sand.u32 %s474, 1
          %s1776 = smul.addr %s1775, 8
          %s1777 = scalar_lea.vmem [#allocation16], %s1776
          %1778 = dma.done %s1774, 128
        $region136: #{tpu_custom_call.1} parent=127 // pred_fallthru
          _
      $region128: #{tpu_custom_call.1} parent=5 // pred_fallthru
        _
    $region6: #{tpu_custom_call.1} parent=1 // loop_footer
      %s39 = sadd.s32 1, %s35
    $region7: #{tpu_custom_call.1} parent=1 // loop_footer_branch
      %34 = sbr.rel target = $region3
    $region8: #{tpu_custom_call.1} parent=1 // loop_exit
      _
    %1779 = vsyncpa [#allocation7], 1
    %s1780 = scalar_lea.sflag [#allocation7], 1
    %1781 = vsyncpa %s1780, 1
    %1782 = vsyncpa [#allocation10], 1
    %1783 = vsyncpa [#allocation13], 1
    %1784 = vsyncpa [#allocation8], 1
    %s1785 = scalar_lea.sflag [#allocation8], 1
    %1786 = vsyncpa %s1785, 1
    %1787 = vsyncpa [#allocation17], 1
    %s1788 = scalar_lea.sflag [#allocation17], 1
    %1789 = vsyncpa %s1788, 1

</llo_original>
